<compile_context>
chip_gen: v5e
topology: v5e:2x2
jax: 0.10.0
libtpu: 0.0.40
codegen_flags: <defaults>
</compile_context>

<pallas_src>
import functools

import jax
import jax.numpy as jnp
from jax import lax
from jax.experimental import pallas as pl
from jax.experimental.pallas import tpu as pltpu

_TILE_B = 8  # batch tile size (sublane-aligned); grid runs over batch tiles


# ----------------------------------------------------------------------------
# Fused kernel: conv1+pool1 -> conv2+pool2 -> fc1 -> fc2 -> fc3 (per batch tile)
# ----------------------------------------------------------------------------
def _mnist_fused_kernel(x_ref, b1e_ref, b1o_ref, c1b_ref,
                        b2e_ref, b2o_ref, c2b_ref,
                        wf1_ref, bf1_ref, wf2_ref, bf2_ref, wf3_ref, bf3_ref,
                        out_ref, *, tile_b):
    TB = tile_b
    x = x_ref[...]                                     # (28, TB, 28) f32

    # ---- conv1 3x3 (1->8) + ReLU + 2x2 max-pool, as banded matmuls ---------
    # accumulator lanes = pooled_w_pos * 8 + out_channel  (13*8 = 104 lanes)
    acc_e = jnp.zeros((26 * TB, 104), jnp.float32)     # even conv columns
    acc_o = jnp.zeros((26 * TB, 104), jnp.float32)     # odd  conv columns
    for kh in range(3):
        rows = x[kh:kh + 26].reshape(26 * TB, 28).astype(jnp.bfloat16)
        acc_e += jnp.dot(rows, b1e_ref[kh], preferred_element_type=jnp.float32)
        acc_o += jnp.dot(rows, b1o_ref[kh], preferred_element_type=jnp.float32)
    y1 = jnp.maximum(jnp.maximum(acc_e, acc_o) + c1b_ref[...], 0.0)  # w-pool+bias+ReLU
    y1 = y1.reshape(13, 2 * TB, 104)
    p1 = jnp.maximum(y1[:, :TB, :], y1[:, TB:, :])     # h-pool -> (13, TB, 104)

    # ---- conv2 5x5 (8->16) + ReLU + 2x2 max-pool ----------------------------
    # accumulator lanes = pooled_w_pos * 16 + out_channel  (4*16 = 64 lanes)
    acc_e = jnp.zeros((9 * TB, 64), jnp.float32)
    acc_o = jnp.zeros((9 * TB, 64), jnp.float32)
    for kh in range(5):
        rows = p1[kh:kh + 9].reshape(9 * TB, 104).astype(jnp.bfloat16)
        acc_e += jnp.dot(rows, b2e_ref[kh], preferred_element_type=jnp.float32)
        acc_o += jnp.dot(rows, b2o_ref[kh], preferred_element_type=jnp.float32)
    y2 = jnp.maximum(jnp.maximum(acc_e, acc_o) + c2b_ref[...], 0.0)
    y2 = y2.reshape(9, TB, 64)[:8]                     # drop conv row 8 (floor pool)
    y2 = y2.reshape(4, 2 * TB, 64)
    p2 = jnp.maximum(y2[:, :TB, :], y2[:, TB:, :])     # (4, TB, 64)

    # ---- fc1 -> fc2 -> fc3 (all VMEM resident) ------------------------------
    acc = jnp.zeros((TB, 120), jnp.float32)
    for h in range(4):                                 # contract over the 4 pooled rows
        acc += jnp.dot(p2[h].astype(jnp.bfloat16), wf1_ref[h],
                       preferred_element_type=jnp.float32)
    h1 = jnp.maximum(acc + bf1_ref[...], 0.0).astype(jnp.bfloat16)          # (TB, 120)
    h2 = jnp.dot(h1, wf2_ref[...], preferred_element_type=jnp.float32) + bf2_ref[...]
    h2 = jnp.maximum(h2, 0.0).astype(jnp.bfloat16)                          # (TB, 84)
    logits = jnp.dot(h2, wf3_ref[...], preferred_element_type=jnp.float32) + bf3_ref[...]
    out_ref[...] = logits.astype(out_ref.dtype)                             # (TB, 10)


# ----------------------------------------------------------------------------
# One-time weight repacking (done outside the kernel, once)
# ----------------------------------------------------------------------------
def _conv1_bands(w1, parity):
    # w1: (8, 1, 3, 3). Returns (3, 28, 104):
    #   B[kh][m, p*8 + o] = w1[o, 0, kh, m - (2p + parity)]  if tap in [0,2] else 0
    w = w1[:, 0]                                      # (8, 3, 3)
    m = jnp.arange(28)[:, None]                       # input column index
    col = jnp.arange(104)[None, :]
    p, o = col // 8, col % 8
    bands = []
    for kh in range(3):
        tap = m - (2 * p + parity)
        vals = w[o, kh, jnp.clip(tap, 0, 2)]
        bands.append(jnp.where((tap >= 0) & (tap <= 2), vals, 0.0))
    return jnp.stack(bands).astype(jnp.bfloat16)


def _conv2_bands(w2, parity):
    # w2: (16, 8, 5, 5). Returns (5, 104, 64):
    #   B[kh][jw*8 + c, q*16 + o] = w2[o, c, kh, jw - (2q + parity)]  if tap in [0,4]
    l = jnp.arange(104)[:, None]
    jw, c = l // 8, l % 8
    col = jnp.arange(64)[None, :]
    q, o = col // 16, col % 16
    bands = []
    for kh in range(5):
        tap = jw - (2 * q + parity)
        vals = w2[o, c, kh, jnp.clip(tap, 0, 4)]
        bands.append(jnp.where((tap >= 0) & (tap <= 4), vals, 0.0))
    return jnp.stack(bands).astype(jnp.bfloat16)


def _fc1_pack(fc1_w):
    # PyTorch flatten order is (C=16, H=4, W=4): flat = o*16 + h*4 + q.
    # Kernel activation layout is p2[h][n, q*16 + o]  ->  W[h, q*16+o, f].
    h = jnp.arange(4)[:, None, None]
    l = jnp.arange(64)[None, :, None]
    f = jnp.arange(120)[None, None, :]
    q, o = l // 16, l % 16
    return fc1_w[f, o * 16 + h * 4 + q].astype(jnp.bfloat16)   # (4, 64, 120)


def pack_params(params):
    return {
        "b1e": _conv1_bands(params["conv1_w"], 0),
        "b1o": _conv1_bands(params["conv1_w"], 1),
        "c1b": jnp.tile(params["conv1_b"], 13).reshape(1, 104).astype(jnp.float32),
        "b2e": _conv2_bands(params["conv2_w"], 0),
        "b2o": _conv2_bands(params["conv2_w"], 1),
        "c2b": jnp.tile(params["conv2_b"], 4).reshape(1, 64).astype(jnp.float32),
        "wf1": _fc1_pack(params["fc1_w"]),
        "bf1": params["fc1_b"].reshape(1, 120).astype(jnp.float32),
        "wf2": params["fc2_w"].T.astype(jnp.bfloat16),          # (120, 84)
        "bf2": params["fc2_b"].reshape(1, 84).astype(jnp.float32),
        "wf3": params["fc3_w"].T.astype(jnp.bfloat16),          # (84, 10)
        "bf3": params["fc3_b"].reshape(1, 10).astype(jnp.float32),
    }


# ----------------------------------------------------------------------------
# Forward wrapper: batch-tiled fused pallas_call
# ----------------------------------------------------------------------------
def mnist_cnn_forward(x_nchw, packed, *, tile_b=_TILE_B):
    N = x_nchw.shape[0]
    assert x_nchw.shape[1:] == (1, 28, 28)
    n_pad = ((N + tile_b - 1) // tile_b) * tile_b

    x = x_nchw.reshape(N, 28, 28).astype(jnp.float32)
    if n_pad != N:
        x = jnp.pad(x, ((0, n_pad - N), (0, 0), (0, 0)))
    x_t = jnp.transpose(x, (1, 0, 2))                 # (28, n_pad, 28): H, batch, W

    order = ["b1e", "b1o", "c1b", "b2e", "b2o", "c2b",
             "wf1", "bf1", "wf2", "bf2", "wf3", "bf3"]
    weights = [packed[k] for k in order]

    def wspec(a):
        nd = a.ndim
        return pl.BlockSpec(a.shape, lambda i: (0,) * nd)   # whole-array, VMEM resident

    kernel = functools.partial(_mnist_fused_kernel, tile_b=tile_b)
    out = pl.pallas_call(
        kernel,
        out_shape=jax.ShapeDtypeStruct((n_pad, 10), jnp.float32),
        grid=(n_pad // tile_b,),
        in_specs=[pl.BlockSpec((28, tile_b, 28), lambda i: (0, i, 0))]
                 + [wspec(a) for a in weights],
        out_specs=pl.BlockSpec((tile_b, 10), lambda i: (i, 0)),
        compiler_params=pltpu.CompilerParams(
            dimension_semantics=("parallel",)),
    )(x_t, *weights)
    return out[:N]


# ----------------------------------------------------------------------------
# Parameters + pure-JAX reference (for validation)
# ----------------------------------------------------------------------------
def init_params(key):
    """Deterministic init; PyTorch-style uniform(-1/sqrt(fan_in), 1/sqrt(fan_in))."""
    def u(k, shape, fan_in):
        bound = 1.0 / jnp.sqrt(jnp.float32(fan_in))
        return jax.random.uniform(k, shape, jnp.float32, -bound, bound)

    ks = jax.random.split(key, 10)
    return {
        "conv1_w": u(ks[0], (8, 1, 3, 3), 1 * 3 * 3),
        "conv1_b": u(ks[1], (8,), 1 * 3 * 3),
        "conv2_w": u(ks[2], (16, 8, 5, 5), 8 * 5 * 5),
        "conv2_b": u(ks[3], (16,), 8 * 5 * 5),
        "fc1_w": u(ks[4], (120, 256), 256),
        "fc1_b": u(ks[5], (120,), 256),
        "fc2_w": u(ks[6], (84, 120), 120),
        "fc2_b": u(ks[7], (84,), 120),
        "fc3_w": u(ks[8], (10, 84), 84),
        "fc3_b": u(ks[9], (10,), 84),
    }


def _pool_ref(y):
    n, c, hh, ww = y.shape
    y = y[:, :, : (hh // 2) * 2, : (ww // 2) * 2]
    return y.reshape(n, c, hh // 2, 2, ww // 2, 2).max(axis=(3, 5))


def reference_forward(x_nchw, params):
    dn = ("NCHW", "OIHW", "NCHW")
    y = lax.conv_general_dilated(x_nchw, params["conv1_w"], (1, 1), "VALID",
                                 dimension_numbers=dn)
    y = jax.nn.relu(y + params["conv1_b"][None, :, None, None])
    y = _pool_ref(y)
    y = lax.conv_general_dilated(y, params["conv2_w"], (1, 1), "VALID",
                                 dimension_numbers=dn)
    y = jax.nn.relu(y + params["conv2_b"][None, :, None, None])
    y = _pool_ref(y)
    y = y.reshape(y.shape[0], -1)
    y = jax.nn.relu(y @ params["fc1_w"].T + params["fc1_b"])
    y = jax.nn.relu(y @ params["fc2_w"].T + params["fc2_b"])
    return y @ params["fc3_w"].T + params["fc3_b"]


if __name__ == "__main__":
    key = jax.random.PRNGKey(0)
    k_params, k_x = jax.random.split(key)
    params = init_params(k_params)
    packed = pack_params(params)          # weight repacking happens once, outside forward

    # MNIST-shaped input (28x28 required by the 16*4*4 flatten in the module).
    x = jax.random.normal(k_x, (2, 1, 28, 28), dtype=jnp.float32)

    fwd = jax.jit(mnist_cnn_forward)
    logits = fwd(x, packed)
    jax.block_until_ready(logits)

    ref = reference_forward(x, params)
    err = float(jnp.max(jnp.abs(logits - ref)))
    assert logits.shape == (2, 10) and logits.dtype == jnp.float32
    assert err < 0.1, f"mismatch vs reference: max|diff| = {err}"
    print("KERNEL_OK")
</pallas_src>

<mosaic_0001>
module attributes {stable_mosaic.version = 11 : i64} {
  func.func @_mnist_fused_kernel(%arg0: i32, %arg1: memref<28x8x28xf32, #tpu.memory_space<vmem>>, %arg2: memref<3x28x104xbf16, #tpu.memory_space<vmem>>, %arg3: memref<3x28x104xbf16, #tpu.memory_space<vmem>>, %arg4: memref<1x104xf32, #tpu.memory_space<vmem>>, %arg5: memref<5x104x64xbf16, #tpu.memory_space<vmem>>, %arg6: memref<5x104x64xbf16, #tpu.memory_space<vmem>>, %arg7: memref<1x64xf32, #tpu.memory_space<vmem>>, %arg8: memref<4x64x120xbf16, #tpu.memory_space<vmem>>, %arg9: memref<1x120xf32, #tpu.memory_space<vmem>>, %arg10: memref<120x84xbf16, #tpu.memory_space<vmem>>, %arg11: memref<1x84xf32, #tpu.memory_space<vmem>>, %arg12: memref<84x10xbf16, #tpu.memory_space<vmem>>, %arg13: memref<1x10xf32, #tpu.memory_space<vmem>>, %arg14: memref<8x10xf32, #tpu.memory_space<vmem>>) attributes {dimension_semantics = [#tpu.dimension_semantics<parallel>], iteration_bounds = array<i64: 1>, scalar_prefetch = 0 : i64, scratch_operands = 0 : i64, tpu.core_type = #tpu.core_type<tc>, window_params = [{transform_indices = @transform_0, window_bounds = array<i64: 28, 8, 28>}, {pipeline_mode = #tpu.pipeline_mode<synchronous>, transform_indices = @transform_1, window_bounds = array<i64: 3, 28, 104>}, {pipeline_mode = #tpu.pipeline_mode<synchronous>, transform_indices = @transform_2, window_bounds = array<i64: 3, 28, 104>}, {pipeline_mode = #tpu.pipeline_mode<synchronous>, transform_indices = @transform_3, window_bounds = array<i64: 1, 104>}, {pipeline_mode = #tpu.pipeline_mode<synchronous>, transform_indices = @transform_4, window_bounds = array<i64: 5, 104, 64>}, {pipeline_mode = #tpu.pipeline_mode<synchronous>, transform_indices = @transform_5, window_bounds = array<i64: 5, 104, 64>}, {pipeline_mode = #tpu.pipeline_mode<synchronous>, transform_indices = @transform_6, window_bounds = array<i64: 1, 64>}, {pipeline_mode = #tpu.pipeline_mode<synchronous>, transform_indices = @transform_7, window_bounds = array<i64: 4, 64, 120>}, {pipeline_mode = #tpu.pipeline_mode<synchronous>, transform_indices = @transform_8, window_bounds = array<i64: 1, 120>}, {pipeline_mode = #tpu.pipeline_mode<synchronous>, transform_indices = @transform_9, window_bounds = array<i64: 120, 84>}, {pipeline_mode = #tpu.pipeline_mode<synchronous>, transform_indices = @transform_10, window_bounds = array<i64: 1, 84>}, {pipeline_mode = #tpu.pipeline_mode<synchronous>, transform_indices = @transform_11, window_bounds = array<i64: 84, 10>}, {pipeline_mode = #tpu.pipeline_mode<synchronous>, transform_indices = @transform_12, window_bounds = array<i64: 1, 10>}, {transform_indices = @transform_13, window_bounds = array<i64: 8, 10>}]} {
    %c0 = arith.constant 0 : index
    %c0_0 = arith.constant 0 : index
    %c0_1 = arith.constant 0 : index
    %0 = vector.load %arg1[%c0, %c0_0, %c0_1] : memref<28x8x28xf32, #tpu.memory_space<vmem>>, vector<28x8x28xf32>
    %cst = arith.constant 0.000000e+00 : f32
    %1 = vector.broadcast %cst : f32 to vector<208x104xf32>
    %cst_2 = arith.constant 0.000000e+00 : f32
    %2 = vector.broadcast %cst_2 : f32 to vector<208x104xf32>
    %3 = vector.extract_strided_slice %0 {offsets = [0, 0, 0], sizes = [26, 8, 28], strides = [1, 1, 1]} : vector<28x8x28xf32> to vector<26x8x28xf32>
    %4 = vector.shape_cast %3 : vector<26x8x28xf32> to vector<208x28xf32>
    %5 = arith.truncf %4 : vector<208x28xf32> to vector<208x28xbf16>
    %c0_3 = arith.constant 0 : index
    %c0_4 = arith.constant 0 : index
    %c0_5 = arith.constant 0 : index
    %6 = vector.load %arg2[%c0_3, %c0_4, %c0_5] : memref<3x28x104xbf16, #tpu.memory_space<vmem>>, vector<1x28x104xbf16>
    %7 = vector.shape_cast %6 : vector<1x28x104xbf16> to vector<28x104xbf16>
    %cst_6 = arith.constant dense<0.000000e+00> : vector<208x104xf32>
    %8 = tpu.matmul %5, %7, %cst_6 {dimension_numbers = #tpu.dot_dimension_numbers<[1], [0], [0], [1], [0, 0, 1, 1], [], []>} : vector<208x28xbf16>, vector<28x104xbf16>, vector<208x104xf32> -> vector<208x104xf32>
    %9 = arith.addf %1, %8 : vector<208x104xf32>
    %c0_7 = arith.constant 0 : index
    %c0_8 = arith.constant 0 : index
    %c0_9 = arith.constant 0 : index
    %10 = vector.load %arg3[%c0_7, %c0_8, %c0_9] : memref<3x28x104xbf16, #tpu.memory_space<vmem>>, vector<1x28x104xbf16>
    %11 = vector.shape_cast %10 : vector<1x28x104xbf16> to vector<28x104xbf16>
    %cst_10 = arith.constant dense<0.000000e+00> : vector<208x104xf32>
    %12 = tpu.matmul %5, %11, %cst_10 {dimension_numbers = #tpu.dot_dimension_numbers<[1], [0], [0], [1], [0, 0, 1, 1], [], []>} : vector<208x28xbf16>, vector<28x104xbf16>, vector<208x104xf32> -> vector<208x104xf32>
    %13 = arith.addf %2, %12 : vector<208x104xf32>
    %14 = vector.extract_strided_slice %0 {offsets = [1, 0, 0], sizes = [26, 8, 28], strides = [1, 1, 1]} : vector<28x8x28xf32> to vector<26x8x28xf32>
    %15 = vector.shape_cast %14 : vector<26x8x28xf32> to vector<208x28xf32>
    %16 = arith.truncf %15 : vector<208x28xf32> to vector<208x28xbf16>
    %c1 = arith.constant 1 : index
    %c0_11 = arith.constant 0 : index
    %c0_12 = arith.constant 0 : index
    %17 = vector.load %arg2[%c1, %c0_11, %c0_12] : memref<3x28x104xbf16, #tpu.memory_space<vmem>>, vector<1x28x104xbf16>
    %18 = vector.shape_cast %17 : vector<1x28x104xbf16> to vector<28x104xbf16>
    %cst_13 = arith.constant dense<0.000000e+00> : vector<208x104xf32>
    %19 = tpu.matmul %16, %18, %cst_13 {dimension_numbers = #tpu.dot_dimension_numbers<[1], [0], [0], [1], [0, 0, 1, 1], [], []>} : vector<208x28xbf16>, vector<28x104xbf16>, vector<208x104xf32> -> vector<208x104xf32>
    %20 = arith.addf %9, %19 : vector<208x104xf32>
    %c1_14 = arith.constant 1 : index
    %c0_15 = arith.constant 0 : index
    %c0_16 = arith.constant 0 : index
    %21 = vector.load %arg3[%c1_14, %c0_15, %c0_16] : memref<3x28x104xbf16, #tpu.memory_space<vmem>>, vector<1x28x104xbf16>
    %22 = vector.shape_cast %21 : vector<1x28x104xbf16> to vector<28x104xbf16>
    %cst_17 = arith.constant dense<0.000000e+00> : vector<208x104xf32>
    %23 = tpu.matmul %16, %22, %cst_17 {dimension_numbers = #tpu.dot_dimension_numbers<[1], [0], [0], [1], [0, 0, 1, 1], [], []>} : vector<208x28xbf16>, vector<28x104xbf16>, vector<208x104xf32> -> vector<208x104xf32>
    %24 = arith.addf %13, %23 : vector<208x104xf32>
    %25 = vector.extract_strided_slice %0 {offsets = [2, 0, 0], sizes = [26, 8, 28], strides = [1, 1, 1]} : vector<28x8x28xf32> to vector<26x8x28xf32>
    %26 = vector.shape_cast %25 : vector<26x8x28xf32> to vector<208x28xf32>
    %27 = arith.truncf %26 : vector<208x28xf32> to vector<208x28xbf16>
    %c2 = arith.constant 2 : index
    %c0_18 = arith.constant 0 : index
    %c0_19 = arith.constant 0 : index
    %28 = vector.load %arg2[%c2, %c0_18, %c0_19] : memref<3x28x104xbf16, #tpu.memory_space<vmem>>, vector<1x28x104xbf16>
    %29 = vector.shape_cast %28 : vector<1x28x104xbf16> to vector<28x104xbf16>
    %cst_20 = arith.constant dense<0.000000e+00> : vector<208x104xf32>
    %30 = tpu.matmul %27, %29, %cst_20 {dimension_numbers = #tpu.dot_dimension_numbers<[1], [0], [0], [1], [0, 0, 1, 1], [], []>} : vector<208x28xbf16>, vector<28x104xbf16>, vector<208x104xf32> -> vector<208x104xf32>
    %31 = arith.addf %20, %30 : vector<208x104xf32>
    %c2_21 = arith.constant 2 : index
    %c0_22 = arith.constant 0 : index
    %c0_23 = arith.constant 0 : index
    %32 = vector.load %arg3[%c2_21, %c0_22, %c0_23] : memref<3x28x104xbf16, #tpu.memory_space<vmem>>, vector<1x28x104xbf16>
    %33 = vector.shape_cast %32 : vector<1x28x104xbf16> to vector<28x104xbf16>
    %cst_24 = arith.constant dense<0.000000e+00> : vector<208x104xf32>
    %34 = tpu.matmul %27, %33, %cst_24 {dimension_numbers = #tpu.dot_dimension_numbers<[1], [0], [0], [1], [0, 0, 1, 1], [], []>} : vector<208x28xbf16>, vector<28x104xbf16>, vector<208x104xf32> -> vector<208x104xf32>
    %35 = arith.addf %24, %34 : vector<208x104xf32>
    %36 = arith.maximumf %31, %35 : vector<208x104xf32>
    %c0_25 = arith.constant 0 : index
    %c0_26 = arith.constant 0 : index
    %37 = vector.load %arg4[%c0_25, %c0_26] : memref<1x104xf32, #tpu.memory_space<vmem>>, vector<1x104xf32>
    %38 = vector.broadcast %37 : vector<1x104xf32> to vector<208x104xf32>
    %39 = arith.addf %36, %38 : vector<208x104xf32>
    %cst_27 = arith.constant 0.000000e+00 : f32
    %40 = vector.broadcast %cst_27 : f32 to vector<208x104xf32>
    %41 = arith.maximumf %39, %40 : vector<208x104xf32>
    %42 = vector.shape_cast %41 : vector<208x104xf32> to vector<13x16x104xf32>
    %43 = vector.extract_strided_slice %42 {offsets = [0, 0, 0], sizes = [13, 8, 104], strides = [1, 1, 1]} : vector<13x16x104xf32> to vector<13x8x104xf32>
    %44 = vector.extract_strided_slice %42 {offsets = [0, 8, 0], sizes = [13, 8, 104], strides = [1, 1, 1]} : vector<13x16x104xf32> to vector<13x8x104xf32>
    %45 = arith.maximumf %43, %44 : vector<13x8x104xf32>
    %cst_28 = arith.constant 0.000000e+00 : f32
    %46 = vector.broadcast %cst_28 : f32 to vector<72x64xf32>
    %cst_29 = arith.constant 0.000000e+00 : f32
    %47 = vector.broadcast %cst_29 : f32 to vector<72x64xf32>
    %48 = vector.extract_strided_slice %45 {offsets = [0, 0, 0], sizes = [9, 8, 104], strides = [1, 1, 1]} : vector<13x8x104xf32> to vector<9x8x104xf32>
    %49 = vector.shape_cast %48 : vector<9x8x104xf32> to vector<72x104xf32>
    %50 = arith.truncf %49 : vector<72x104xf32> to vector<72x104xbf16>
    %c0_30 = arith.constant 0 : index
    %c0_31 = arith.constant 0 : index
    %c0_32 = arith.constant 0 : index
    %51 = vector.load %arg5[%c0_30, %c0_31, %c0_32] : memref<5x104x64xbf16, #tpu.memory_space<vmem>>, vector<1x104x64xbf16>
    %52 = vector.shape_cast %51 : vector<1x104x64xbf16> to vector<104x64xbf16>
    %cst_33 = arith.constant dense<0.000000e+00> : vector<72x64xf32>
    %53 = tpu.matmul %50, %52, %cst_33 {dimension_numbers = #tpu.dot_dimension_numbers<[1], [0], [0], [1], [0, 0, 1, 1], [], []>} : vector<72x104xbf16>, vector<104x64xbf16>, vector<72x64xf32> -> vector<72x64xf32>
    %54 = arith.addf %46, %53 : vector<72x64xf32>
    %c0_34 = arith.constant 0 : index
    %c0_35 = arith.constant 0 : index
    %c0_36 = arith.constant 0 : index
    %55 = vector.load %arg6[%c0_34, %c0_35, %c0_36] : memref<5x104x64xbf16, #tpu.memory_space<vmem>>, vector<1x104x64xbf16>
    %56 = vector.shape_cast %55 : vector<1x104x64xbf16> to vector<104x64xbf16>
    %cst_37 = arith.constant dense<0.000000e+00> : vector<72x64xf32>
    %57 = tpu.matmul %50, %56, %cst_37 {dimension_numbers = #tpu.dot_dimension_numbers<[1], [0], [0], [1], [0, 0, 1, 1], [], []>} : vector<72x104xbf16>, vector<104x64xbf16>, vector<72x64xf32> -> vector<72x64xf32>
    %58 = arith.addf %47, %57 : vector<72x64xf32>
    %59 = vector.extract_strided_slice %45 {offsets = [1, 0, 0], sizes = [9, 8, 104], strides = [1, 1, 1]} : vector<13x8x104xf32> to vector<9x8x104xf32>
    %60 = vector.shape_cast %59 : vector<9x8x104xf32> to vector<72x104xf32>
    %61 = arith.truncf %60 : vector<72x104xf32> to vector<72x104xbf16>
    %c1_38 = arith.constant 1 : index
    %c0_39 = arith.constant 0 : index
    %c0_40 = arith.constant 0 : index
    %62 = vector.load %arg5[%c1_38, %c0_39, %c0_40] : memref<5x104x64xbf16, #tpu.memory_space<vmem>>, vector<1x104x64xbf16>
    %63 = vector.shape_cast %62 : vector<1x104x64xbf16> to vector<104x64xbf16>
    %cst_41 = arith.constant dense<0.000000e+00> : vector<72x64xf32>
    %64 = tpu.matmul %61, %63, %cst_41 {dimension_numbers = #tpu.dot_dimension_numbers<[1], [0], [0], [1], [0, 0, 1, 1], [], []>} : vector<72x104xbf16>, vector<104x64xbf16>, vector<72x64xf32> -> vector<72x64xf32>
    %65 = arith.addf %54, %64 : vector<72x64xf32>
    %c1_42 = arith.constant 1 : index
    %c0_43 = arith.constant 0 : index
    %c0_44 = arith.constant 0 : index
    %66 = vector.load %arg6[%c1_42, %c0_43, %c0_44] : memref<5x104x64xbf16, #tpu.memory_space<vmem>>, vector<1x104x64xbf16>
    %67 = vector.shape_cast %66 : vector<1x104x64xbf16> to vector<104x64xbf16>
    %cst_45 = arith.constant dense<0.000000e+00> : vector<72x64xf32>
    %68 = tpu.matmul %61, %67, %cst_45 {dimension_numbers = #tpu.dot_dimension_numbers<[1], [0], [0], [1], [0, 0, 1, 1], [], []>} : vector<72x104xbf16>, vector<104x64xbf16>, vector<72x64xf32> -> vector<72x64xf32>
    %69 = arith.addf %58, %68 : vector<72x64xf32>
    %70 = vector.extract_strided_slice %45 {offsets = [2, 0, 0], sizes = [9, 8, 104], strides = [1, 1, 1]} : vector<13x8x104xf32> to vector<9x8x104xf32>
    %71 = vector.shape_cast %70 : vector<9x8x104xf32> to vector<72x104xf32>
    %72 = arith.truncf %71 : vector<72x104xf32> to vector<72x104xbf16>
    %c2_46 = arith.constant 2 : index
    %c0_47 = arith.constant 0 : index
    %c0_48 = arith.constant 0 : index
    %73 = vector.load %arg5[%c2_46, %c0_47, %c0_48] : memref<5x104x64xbf16, #tpu.memory_space<vmem>>, vector<1x104x64xbf16>
    %74 = vector.shape_cast %73 : vector<1x104x64xbf16> to vector<104x64xbf16>
    %cst_49 = arith.constant dense<0.000000e+00> : vector<72x64xf32>
    %75 = tpu.matmul %72, %74, %cst_49 {dimension_numbers = #tpu.dot_dimension_numbers<[1], [0], [0], [1], [0, 0, 1, 1], [], []>} : vector<72x104xbf16>, vector<104x64xbf16>, vector<72x64xf32> -> vector<72x64xf32>
    %76 = arith.addf %65, %75 : vector<72x64xf32>
    %c2_50 = arith.constant 2 : index
    %c0_51 = arith.constant 0 : index
    %c0_52 = arith.constant 0 : index
    %77 = vector.load %arg6[%c2_50, %c0_51, %c0_52] : memref<5x104x64xbf16, #tpu.memory_space<vmem>>, vector<1x104x64xbf16>
    %78 = vector.shape_cast %77 : vector<1x104x64xbf16> to vector<104x64xbf16>
    %cst_53 = arith.constant dense<0.000000e+00> : vector<72x64xf32>
    %79 = tpu.matmul %72, %78, %cst_53 {dimension_numbers = #tpu.dot_dimension_numbers<[1], [0], [0], [1], [0, 0, 1, 1], [], []>} : vector<72x104xbf16>, vector<104x64xbf16>, vector<72x64xf32> -> vector<72x64xf32>
    %80 = arith.addf %69, %79 : vector<72x64xf32>
    %81 = vector.extract_strided_slice %45 {offsets = [3, 0, 0], sizes = [9, 8, 104], strides = [1, 1, 1]} : vector<13x8x104xf32> to vector<9x8x104xf32>
    %82 = vector.shape_cast %81 : vector<9x8x104xf32> to vector<72x104xf32>
    %83 = arith.truncf %82 : vector<72x104xf32> to vector<72x104xbf16>
    %c3 = arith.constant 3 : index
    %c0_54 = arith.constant 0 : index
    %c0_55 = arith.constant 0 : index
    %84 = vector.load %arg5[%c3, %c0_54, %c0_55] : memref<5x104x64xbf16, #tpu.memory_space<vmem>>, vector<1x104x64xbf16>
    %85 = vector.shape_cast %84 : vector<1x104x64xbf16> to vector<104x64xbf16>
    %cst_56 = arith.constant dense<0.000000e+00> : vector<72x64xf32>
    %86 = tpu.matmul %83, %85, %cst_56 {dimension_numbers = #tpu.dot_dimension_numbers<[1], [0], [0], [1], [0, 0, 1, 1], [], []>} : vector<72x104xbf16>, vector<104x64xbf16>, vector<72x64xf32> -> vector<72x64xf32>
    %87 = arith.addf %76, %86 : vector<72x64xf32>
    %c3_57 = arith.constant 3 : index
    %c0_58 = arith.constant 0 : index
    %c0_59 = arith.constant 0 : index
    %88 = vector.load %arg6[%c3_57, %c0_58, %c0_59] : memref<5x104x64xbf16, #tpu.memory_space<vmem>>, vector<1x104x64xbf16>
    %89 = vector.shape_cast %88 : vector<1x104x64xbf16> to vector<104x64xbf16>
    %cst_60 = arith.constant dense<0.000000e+00> : vector<72x64xf32>
    %90 = tpu.matmul %83, %89, %cst_60 {dimension_numbers = #tpu.dot_dimension_numbers<[1], [0], [0], [1], [0, 0, 1, 1], [], []>} : vector<72x104xbf16>, vector<104x64xbf16>, vector<72x64xf32> -> vector<72x64xf32>
    %91 = arith.addf %80, %90 : vector<72x64xf32>
    %92 = vector.extract_strided_slice %45 {offsets = [4, 0, 0], sizes = [9, 8, 104], strides = [1, 1, 1]} : vector<13x8x104xf32> to vector<9x8x104xf32>
    %93 = vector.shape_cast %92 : vector<9x8x104xf32> to vector<72x104xf32>
    %94 = arith.truncf %93 : vector<72x104xf32> to vector<72x104xbf16>
    %c4 = arith.constant 4 : index
    %c0_61 = arith.constant 0 : index
    %c0_62 = arith.constant 0 : index
    %95 = vector.load %arg5[%c4, %c0_61, %c0_62] : memref<5x104x64xbf16, #tpu.memory_space<vmem>>, vector<1x104x64xbf16>
    %96 = vector.shape_cast %95 : vector<1x104x64xbf16> to vector<104x64xbf16>
    %cst_63 = arith.constant dense<0.000000e+00> : vector<72x64xf32>
    %97 = tpu.matmul %94, %96, %cst_63 {dimension_numbers = #tpu.dot_dimension_numbers<[1], [0], [0], [1], [0, 0, 1, 1], [], []>} : vector<72x104xbf16>, vector<104x64xbf16>, vector<72x64xf32> -> vector<72x64xf32>
    %98 = arith.addf %87, %97 : vector<72x64xf32>
    %c4_64 = arith.constant 4 : index
    %c0_65 = arith.constant 0 : index
    %c0_66 = arith.constant 0 : index
    %99 = vector.load %arg6[%c4_64, %c0_65, %c0_66] : memref<5x104x64xbf16, #tpu.memory_space<vmem>>, vector<1x104x64xbf16>
    %100 = vector.shape_cast %99 : vector<1x104x64xbf16> to vector<104x64xbf16>
    %cst_67 = arith.constant dense<0.000000e+00> : vector<72x64xf32>
    %101 = tpu.matmul %94, %100, %cst_67 {dimension_numbers = #tpu.dot_dimension_numbers<[1], [0], [0], [1], [0, 0, 1, 1], [], []>} : vector<72x104xbf16>, vector<104x64xbf16>, vector<72x64xf32> -> vector<72x64xf32>
    %102 = arith.addf %91, %101 : vector<72x64xf32>
    %103 = arith.maximumf %98, %102 : vector<72x64xf32>
    %c0_68 = arith.constant 0 : index
    %c0_69 = arith.constant 0 : index
    %104 = vector.load %arg7[%c0_68, %c0_69] : memref<1x64xf32, #tpu.memory_space<vmem>>, vector<1x64xf32>
    %105 = vector.broadcast %104 : vector<1x64xf32> to vector<72x64xf32>
    %106 = arith.addf %103, %105 : vector<72x64xf32>
    %cst_70 = arith.constant 0.000000e+00 : f32
    %107 = vector.broadcast %cst_70 : f32 to vector<72x64xf32>
    %108 = arith.maximumf %106, %107 : vector<72x64xf32>
    %109 = vector.shape_cast %108 : vector<72x64xf32> to vector<9x8x64xf32>
    %110 = vector.extract_strided_slice %109 {offsets = [0, 0, 0], sizes = [8, 8, 64], strides = [1, 1, 1]} : vector<9x8x64xf32> to vector<8x8x64xf32>
    %111 = vector.shape_cast %110 : vector<8x8x64xf32> to vector<4x16x64xf32>
    %112 = vector.extract_strided_slice %111 {offsets = [0, 0, 0], sizes = [4, 8, 64], strides = [1, 1, 1]} : vector<4x16x64xf32> to vector<4x8x64xf32>
    %113 = vector.extract_strided_slice %111 {offsets = [0, 8, 0], sizes = [4, 8, 64], strides = [1, 1, 1]} : vector<4x16x64xf32> to vector<4x8x64xf32>
    %114 = arith.maximumf %112, %113 : vector<4x8x64xf32>
    %cst_71 = arith.constant 0.000000e+00 : f32
    %115 = vector.broadcast %cst_71 : f32 to vector<8x120xf32>
    %116 = vector.extract_strided_slice %114 {offsets = [0, 0, 0], sizes = [1, 8, 64], strides = [1, 1, 1]} : vector<4x8x64xf32> to vector<1x8x64xf32>
    %117 = vector.shape_cast %116 : vector<1x8x64xf32> to vector<8x64xf32>
    %118 = arith.truncf %117 : vector<8x64xf32> to vector<8x64xbf16>
    %c0_72 = arith.constant 0 : index
    %c0_73 = arith.constant 0 : index
    %c0_74 = arith.constant 0 : index
    %119 = vector.load %arg8[%c0_72, %c0_73, %c0_74] : memref<4x64x120xbf16, #tpu.memory_space<vmem>>, vector<1x64x120xbf16>
    %120 = vector.shape_cast %119 : vector<1x64x120xbf16> to vector<64x120xbf16>
    %cst_75 = arith.constant dense<0.000000e+00> : vector<8x120xf32>
    %121 = tpu.matmul %118, %120, %cst_75 {dimension_numbers = #tpu.dot_dimension_numbers<[1], [0], [0], [1], [0, 0, 1, 1], [], []>} : vector<8x64xbf16>, vector<64x120xbf16>, vector<8x120xf32> -> vector<8x120xf32>
    %122 = arith.addf %115, %121 : vector<8x120xf32>
    %123 = vector.extract_strided_slice %114 {offsets = [1, 0, 0], sizes = [1, 8, 64], strides = [1, 1, 1]} : vector<4x8x64xf32> to vector<1x8x64xf32>
    %124 = vector.shape_cast %123 : vector<1x8x64xf32> to vector<8x64xf32>
    %125 = arith.truncf %124 : vector<8x64xf32> to vector<8x64xbf16>
    %c1_76 = arith.constant 1 : index
    %c0_77 = arith.constant 0 : index
    %c0_78 = arith.constant 0 : index
    %126 = vector.load %arg8[%c1_76, %c0_77, %c0_78] : memref<4x64x120xbf16, #tpu.memory_space<vmem>>, vector<1x64x120xbf16>
    %127 = vector.shape_cast %126 : vector<1x64x120xbf16> to vector<64x120xbf16>
    %cst_79 = arith.constant dense<0.000000e+00> : vector<8x120xf32>
    %128 = tpu.matmul %125, %127, %cst_79 {dimension_numbers = #tpu.dot_dimension_numbers<[1], [0], [0], [1], [0, 0, 1, 1], [], []>} : vector<8x64xbf16>, vector<64x120xbf16>, vector<8x120xf32> -> vector<8x120xf32>
    %129 = arith.addf %122, %128 : vector<8x120xf32>
    %130 = vector.extract_strided_slice %114 {offsets = [2, 0, 0], sizes = [1, 8, 64], strides = [1, 1, 1]} : vector<4x8x64xf32> to vector<1x8x64xf32>
    %131 = vector.shape_cast %130 : vector<1x8x64xf32> to vector<8x64xf32>
    %132 = arith.truncf %131 : vector<8x64xf32> to vector<8x64xbf16>
    %c2_80 = arith.constant 2 : index
    %c0_81 = arith.constant 0 : index
    %c0_82 = arith.constant 0 : index
    %133 = vector.load %arg8[%c2_80, %c0_81, %c0_82] : memref<4x64x120xbf16, #tpu.memory_space<vmem>>, vector<1x64x120xbf16>
    %134 = vector.shape_cast %133 : vector<1x64x120xbf16> to vector<64x120xbf16>
    %cst_83 = arith.constant dense<0.000000e+00> : vector<8x120xf32>
    %135 = tpu.matmul %132, %134, %cst_83 {dimension_numbers = #tpu.dot_dimension_numbers<[1], [0], [0], [1], [0, 0, 1, 1], [], []>} : vector<8x64xbf16>, vector<64x120xbf16>, vector<8x120xf32> -> vector<8x120xf32>
    %136 = arith.addf %129, %135 : vector<8x120xf32>
    %137 = vector.extract_strided_slice %114 {offsets = [3, 0, 0], sizes = [1, 8, 64], strides = [1, 1, 1]} : vector<4x8x64xf32> to vector<1x8x64xf32>
    %138 = vector.shape_cast %137 : vector<1x8x64xf32> to vector<8x64xf32>
    %139 = arith.truncf %138 : vector<8x64xf32> to vector<8x64xbf16>
    %c3_84 = arith.constant 3 : index
    %c0_85 = arith.constant 0 : index
    %c0_86 = arith.constant 0 : index
    %140 = vector.load %arg8[%c3_84, %c0_85, %c0_86] : memref<4x64x120xbf16, #tpu.memory_space<vmem>>, vector<1x64x120xbf16>
    %141 = vector.shape_cast %140 : vector<1x64x120xbf16> to vector<64x120xbf16>
    %cst_87 = arith.constant dense<0.000000e+00> : vector<8x120xf32>
    %142 = tpu.matmul %139, %141, %cst_87 {dimension_numbers = #tpu.dot_dimension_numbers<[1], [0], [0], [1], [0, 0, 1, 1], [], []>} : vector<8x64xbf16>, vector<64x120xbf16>, vector<8x120xf32> -> vector<8x120xf32>
    %143 = arith.addf %136, %142 : vector<8x120xf32>
    %c0_88 = arith.constant 0 : index
    %c0_89 = arith.constant 0 : index
    %144 = vector.load %arg9[%c0_88, %c0_89] : memref<1x120xf32, #tpu.memory_space<vmem>>, vector<1x120xf32>
    %145 = vector.broadcast %144 : vector<1x120xf32> to vector<8x120xf32>
    %146 = arith.addf %143, %145 : vector<8x120xf32>
    %cst_90 = arith.constant 0.000000e+00 : f32
    %147 = vector.broadcast %cst_90 : f32 to vector<8x120xf32>
    %148 = arith.maximumf %146, %147 : vector<8x120xf32>
    %149 = arith.truncf %148 : vector<8x120xf32> to vector<8x120xbf16>
    %c0_91 = arith.constant 0 : index
    %c0_92 = arith.constant 0 : index
    %150 = vector.load %arg10[%c0_91, %c0_92] : memref<120x84xbf16, #tpu.memory_space<vmem>>, vector<120x84xbf16>
    %cst_93 = arith.constant dense<0.000000e+00> : vector<8x84xf32>
    %151 = tpu.matmul %149, %150, %cst_93 {dimension_numbers = #tpu.dot_dimension_numbers<[1], [0], [0], [1], [0, 0, 1, 1], [], []>} : vector<8x120xbf16>, vector<120x84xbf16>, vector<8x84xf32> -> vector<8x84xf32>
    %c0_94 = arith.constant 0 : index
    %c0_95 = arith.constant 0 : index
    %152 = vector.load %arg11[%c0_94, %c0_95] : memref<1x84xf32, #tpu.memory_space<vmem>>, vector<1x84xf32>
    %153 = vector.broadcast %152 : vector<1x84xf32> to vector<8x84xf32>
    %154 = arith.addf %151, %153 : vector<8x84xf32>
    %cst_96 = arith.constant 0.000000e+00 : f32
    %155 = vector.broadcast %cst_96 : f32 to vector<8x84xf32>
    %156 = arith.maximumf %154, %155 : vector<8x84xf32>
    %157 = arith.truncf %156 : vector<8x84xf32> to vector<8x84xbf16>
    %c0_97 = arith.constant 0 : index
    %c0_98 = arith.constant 0 : index
    %158 = vector.load %arg12[%c0_97, %c0_98] : memref<84x10xbf16, #tpu.memory_space<vmem>>, vector<84x10xbf16>
    %cst_99 = arith.constant dense<0.000000e+00> : vector<8x10xf32>
    %159 = tpu.matmul %157, %158, %cst_99 {dimension_numbers = #tpu.dot_dimension_numbers<[1], [0], [0], [1], [0, 0, 1, 1], [], []>} : vector<8x84xbf16>, vector<84x10xbf16>, vector<8x10xf32> -> vector<8x10xf32>
    %c0_100 = arith.constant 0 : index
    %c0_101 = arith.constant 0 : index
    %160 = vector.load %arg13[%c0_100, %c0_101] : memref<1x10xf32, #tpu.memory_space<vmem>>, vector<1x10xf32>
    %161 = vector.broadcast %160 : vector<1x10xf32> to vector<8x10xf32>
    %162 = arith.addf %159, %161 : vector<8x10xf32>
    %c0_102 = arith.constant 0 : index
    %c0_103 = arith.constant 0 : index
    %163 = vector.load %arg14[%c0_102, %c0_103] : memref<8x10xf32, #tpu.memory_space<vmem>>, vector<8x10xf32>
    tpu.vector_store %arg14[%c0_102, %c0_103], %162 {strides = array<i32>} : memref<8x10xf32, #tpu.memory_space<vmem>>, vector<8x10xf32>,
    return
  }
  func.func @transform_0(%arg0: i32) -> (i32, i32, i32) {
    %c0_i32 = arith.constant 0 : i32
    %c0_i32_0 = arith.constant 0 : i32
    %c0_i32_1 = arith.constant 0 : i32
    return %c0_i32, %arg0, %c0_i32_0 : i32, i32, i32
  }
  func.func @transform_1(%arg0: i32) -> (i32, i32, i32) {
    %c0_i32 = arith.constant 0 : i32
    %c0_i32_0 = arith.constant 0 : i32
    %c0_i32_1 = arith.constant 0 : i32
    %c0_i32_2 = arith.constant 0 : i32
    return %c0_i32, %c0_i32_0, %c0_i32_1 : i32, i32, i32
  }
  func.func @transform_2(%arg0: i32) -> (i32, i32, i32) {
    %c0_i32 = arith.constant 0 : i32
    %c0_i32_0 = arith.constant 0 : i32
    %c0_i32_1 = arith.constant 0 : i32
    %c0_i32_2 = arith.constant 0 : i32
    return %c0_i32, %c0_i32_0, %c0_i32_1 : i32, i32, i32
  }
  func.func @transform_3(%arg0: i32) -> (i32, i32) {
    %c0_i32 = arith.constant 0 : i32
    %c0_i32_0 = arith.constant 0 : i32
    %c0_i32_1 = arith.constant 0 : i32
    return %c0_i32, %c0_i32_0 : i32, i32
  }
  func.func @transform_4(%arg0: i32) -> (i32, i32, i32) {
    %c0_i32 = arith.constant 0 : i32
    %c0_i32_0 = arith.constant 0 : i32
    %c0_i32_1 = arith.constant 0 : i32
    %c0_i32_2 = arith.constant 0 : i32
    return %c0_i32, %c0_i32_0, %c0_i32_1 : i32, i32, i32
  }
  func.func @transform_5(%arg0: i32) -> (i32, i32, i32) {
    %c0_i32 = arith.constant 0 : i32
    %c0_i32_0 = arith.constant 0 : i32
    %c0_i32_1 = arith.constant 0 : i32
    %c0_i32_2 = arith.constant 0 : i32
    return %c0_i32, %c0_i32_0, %c0_i32_1 : i32, i32, i32
  }
  func.func @transform_6(%arg0: i32) -> (i32, i32) {
    %c0_i32 = arith.constant 0 : i32
    %c0_i32_0 = arith.constant 0 : i32
    %c0_i32_1 = arith.constant 0 : i32
    return %c0_i32, %c0_i32_0 : i32, i32
  }
  func.func @transform_7(%arg0: i32) -> (i32, i32, i32) {
    %c0_i32 = arith.constant 0 : i32
    %c0_i32_0 = arith.constant 0 : i32
    %c0_i32_1 = arith.constant 0 : i32
    %c0_i32_2 = arith.constant 0 : i32
    return %c0_i32, %c0_i32_0, %c0_i32_1 : i32, i32, i32
  }
  func.func @transform_8(%arg0: i32) -> (i32, i32) {
    %c0_i32 = arith.constant 0 : i32
    %c0_i32_0 = arith.constant 0 : i32
    %c0_i32_1 = arith.constant 0 : i32
    return %c0_i32, %c0_i32_0 : i32, i32
  }
  func.func @transform_9(%arg0: i32) -> (i32, i32) {
    %c0_i32 = arith.constant 0 : i32
    %c0_i32_0 = arith.constant 0 : i32
    %c0_i32_1 = arith.constant 0 : i32
    return %c0_i32, %c0_i32_0 : i32, i32
  }
  func.func @transform_10(%arg0: i32) -> (i32, i32) {
    %c0_i32 = arith.constant 0 : i32
    %c0_i32_0 = arith.constant 0 : i32
    %c0_i32_1 = arith.constant 0 : i32
    return %c0_i32, %c0_i32_0 : i32, i32
  }
  func.func @transform_11(%arg0: i32) -> (i32, i32) {
    %c0_i32 = arith.constant 0 : i32
    %c0_i32_0 = arith.constant 0 : i32
    %c0_i32_1 = arith.constant 0 : i32
    return %c0_i32, %c0_i32_0 : i32, i32
  }
  func.func @transform_12(%arg0: i32) -> (i32, i32) {
    %c0_i32 = arith.constant 0 : i32
    %c0_i32_0 = arith.constant 0 : i32
    %c0_i32_1 = arith.constant 0 : i32
    return %c0_i32, %c0_i32_0 : i32, i32
  }
  func.func @transform_13(%arg0: i32) -> (i32, i32) {
    %c0_i32 = arith.constant 0 : i32
    %c0_i32_0 = arith.constant 0 : i32
    return %arg0, %c0_i32 : i32, i32
  }
}

</mosaic_0001>

<llo_original>
// kernel: mnist_cnn_forward.1
$region0: #{mnist_cnn_forward.1}
  #allocation0 [shape = 'u32[]', space=smem, size = 0x4, offset = 0x4, fixed_abs, tag = 'smem constant byte address 0x4 - core index']
  #allocation1 [shape = 'u32[72,128]{1,0:T(1,128)}', space=vmem, size = 0x9000, scoped, tag = 'internal scratch']
  %s0 = inlined_call_operand.vmem [shape: f32[28,8,28], index: 0, kind: input, shape index: {}]
  %s1 = inlined_call_operand.vmem [shape: bf16[3,28,104], index: 1, kind: input, shape index: {}]
  %s2 = inlined_call_operand.vmem [shape: bf16[3,28,104], index: 2, kind: input, shape index: {}]
  %s3 = inlined_call_operand.vmem [shape: f32[1,104], index: 3, kind: input, shape index: {}]
  %s4 = inlined_call_operand.vmem [shape: bf16[5,104,64], index: 4, kind: input, shape index: {}]
  %s5 = inlined_call_operand.vmem [shape: bf16[5,104,64], index: 5, kind: input, shape index: {}]
  %s6 = inlined_call_operand.vmem [shape: f32[1,64], index: 6, kind: input, shape index: {}]
  %s7 = inlined_call_operand.vmem [shape: bf16[4,64,120], index: 7, kind: input, shape index: {}]
  %s8 = inlined_call_operand.vmem [shape: f32[1,120], index: 8, kind: input, shape index: {}]
  %s9 = inlined_call_operand.vmem [shape: bf16[120,84], index: 9, kind: input, shape index: {}]
  %s10 = inlined_call_operand.vmem [shape: f32[1,84], index: 10, kind: input, shape index: {}]
  %s11 = inlined_call_operand.vmem [shape: bf16[84,10], index: 11, kind: input, shape index: {}]
  %s12 = inlined_call_operand.vmem [shape: f32[1,10], index: 12, kind: input, shape index: {}]
  %s13 = inlined_call_operand.vmem [shape: f32[8,10], index: 13, kind: output, shape index: {}]
  %s14 = sld [smem:[#allocation0]]
  $region62: #{mnist_cnn_forward.1} parent=0
    _
  %s16 = ssub.s32 1, %s14
  %s17 = scalar_select 0, %s16, %s14
  // Predicated region
  $region2: #{mnist_cnn_forward.1} parent=0 // pred_check
    _
  $region3: #{mnist_cnn_forward.1} parent=0 // pred_check_branch
    %19 = sbr.rel (0) target = $region5
  $region4: #{mnist_cnn_forward.1} parent=0 // pred_region
    _
  $region5: #{mnist_cnn_forward.1} parent=0 // pred_fallthru
    _
  // Predicated region
  $region6: #{mnist_cnn_forward.1} parent=0 // pred_check
    _
  $region7: #{mnist_cnn_forward.1} parent=0 // pred_check_branch
    %21 = sbr.rel (0) target = $region9
  $region8: #{mnist_cnn_forward.1} parent=0 // pred_region
    _
  $region9: #{mnist_cnn_forward.1} parent=0 // pred_fallthru
    _
  // Predicated region
  $region10: #{mnist_cnn_forward.1} parent=0 // pred_check
    _
  $region11: #{mnist_cnn_forward.1} parent=0 // pred_check_branch
    %23 = sbr.rel (0) target = $region13
  $region12: #{mnist_cnn_forward.1} parent=0 // pred_region
    _
  $region13: #{mnist_cnn_forward.1} parent=0 // pred_fallthru
    _
  // Predicated region
  $region14: #{mnist_cnn_forward.1} parent=0 // pred_check
    _
  $region15: #{mnist_cnn_forward.1} parent=0 // pred_check_branch
    %25 = sbr.rel (0) target = $region17
  $region16: #{mnist_cnn_forward.1} parent=0 // pred_region
    _
  $region17: #{mnist_cnn_forward.1} parent=0 // pred_fallthru
    _
  // Predicated region
  $region18: #{mnist_cnn_forward.1} parent=0 // pred_check
    _
  $region19: #{mnist_cnn_forward.1} parent=0 // pred_check_branch
    %27 = sbr.rel (0) target = $region21
  $region20: #{mnist_cnn_forward.1} parent=0 // pred_region
    _
  $region21: #{mnist_cnn_forward.1} parent=0 // pred_fallthru
    _
  // Predicated region
  $region22: #{mnist_cnn_forward.1} parent=0 // pred_check
    _
  $region23: #{mnist_cnn_forward.1} parent=0 // pred_check_branch
    %29 = sbr.rel (0) target = $region25
  $region24: #{mnist_cnn_forward.1} parent=0 // pred_region
    _
  $region25: #{mnist_cnn_forward.1} parent=0 // pred_fallthru
    _
  // Predicated region
  $region26: #{mnist_cnn_forward.1} parent=0 // pred_check
    _
  $region27: #{mnist_cnn_forward.1} parent=0 // pred_check_branch
    %31 = sbr.rel (0) target = $region29
  $region28: #{mnist_cnn_forward.1} parent=0 // pred_region
    _
  $region29: #{mnist_cnn_forward.1} parent=0 // pred_fallthru
    _
  // Predicated region
  $region30: #{mnist_cnn_forward.1} parent=0 // pred_check
    _
  $region31: #{mnist_cnn_forward.1} parent=0 // pred_check_branch
    %33 = sbr.rel (0) target = $region33
  $region32: #{mnist_cnn_forward.1} parent=0 // pred_region
    _
  $region33: #{mnist_cnn_forward.1} parent=0 // pred_fallthru
    _
  // Predicated region
  $region34: #{mnist_cnn_forward.1} parent=0 // pred_check
    _
  $region35: #{mnist_cnn_forward.1} parent=0 // pred_check_branch
    %35 = sbr.rel (0) target = $region37
  $region36: #{mnist_cnn_forward.1} parent=0 // pred_region
    _
  $region37: #{mnist_cnn_forward.1} parent=0 // pred_fallthru
    _
  // Predicated region
  $region38: #{mnist_cnn_forward.1} parent=0 // pred_check
    _
  $region39: #{mnist_cnn_forward.1} parent=0 // pred_check_branch
    %37 = sbr.rel (0) target = $region41
  $region40: #{mnist_cnn_forward.1} parent=0 // pred_region
    _
  $region41: #{mnist_cnn_forward.1} parent=0 // pred_fallthru
    _
  // Predicated region
  $region42: #{mnist_cnn_forward.1} parent=0 // pred_check
    _
  $region43: #{mnist_cnn_forward.1} parent=0 // pred_check_branch
    %39 = sbr.rel (0) target = $region45
  $region44: #{mnist_cnn_forward.1} parent=0 // pred_region
    _
  $region45: #{mnist_cnn_forward.1} parent=0 // pred_fallthru
    _
  // Predicated region
  $region46: #{mnist_cnn_forward.1} parent=0 // pred_check
    _
  $region47: #{mnist_cnn_forward.1} parent=0 // pred_check_branch
    %41 = sbr.rel (0) target = $region49
  $region48: #{mnist_cnn_forward.1} parent=0 // pred_region
    _
  $region49: #{mnist_cnn_forward.1} parent=0 // pred_fallthru
    _
  // Predicated region
  $region50: #{mnist_cnn_forward.1} parent=0 // pred_check
    _
  $region51: #{mnist_cnn_forward.1} parent=0 // pred_check_branch
    %43 = sbr.rel (0) target = $region53
  $region52: #{mnist_cnn_forward.1} parent=0 // pred_region
    _
  $region53: #{mnist_cnn_forward.1} parent=0 // pred_fallthru
    _
  %v45 = vld [vmem:[%s0] sm:$0xff]
  %v46 = vld [vmem:[%s0 + $0x8] sm:$0xff]
  %v47 = vld [vmem:[%s0 + $0x10] sm:$0xff]
  %v48 = vld [vmem:[%s0 + $0x18] sm:$0xff]
  %v49 = vld [vmem:[%s0 + $0x20] sm:$0xff]
  %v50 = vld [vmem:[%s0 + $0x28] sm:$0xff]
  %v51 = vld [vmem:[%s0 + $0x30] sm:$0xff]
  %v52 = vld [vmem:[%s0 + $0x38] sm:$0xff]
  %v53 = vld [vmem:[%s0 + $0x40] sm:$0xff]
  %v54 = vld [vmem:[%s0 + $0x48] sm:$0xff]
  %v55 = vld [vmem:[%s0 + $0x50] sm:$0xff]
  %v56 = vld [vmem:[%s0 + $0x58] sm:$0xff]
  %v57 = vld [vmem:[%s0 + $0x60] sm:$0xff]
  %v58 = vld [vmem:[%s0 + $0x68] sm:$0xff]
  %v59 = vld [vmem:[%s0 + $0x70] sm:$0xff]
  %v60 = vld [vmem:[%s0 + $0x78] sm:$0xff]
  %v61 = vld [vmem:[%s0 + $0x80] sm:$0xff]
  %v62 = vld [vmem:[%s0 + $0x88] sm:$0xff]
  %v63 = vld [vmem:[%s0 + $0x90] sm:$0xff]
  %v64 = vld [vmem:[%s0 + $0x98] sm:$0xff]
  %v65 = vld [vmem:[%s0 + $0xa0] sm:$0xff]
  %v66 = vld [vmem:[%s0 + $0xa8] sm:$0xff]
  %v67 = vld [vmem:[%s0 + $0xb0] sm:$0xff]
  %v68 = vld [vmem:[%s0 + $0xb8] sm:$0xff]
  %v69 = vld [vmem:[%s0 + $0xc0] sm:$0xff]
  %v70 = vld [vmem:[%s0 + $0xc8] sm:$0xff]
  %v71 = vld [vmem:[%s0 + $0xd0] sm:$0xff]
  %v72 = vld [vmem:[%s0 + $0xd8] sm:$0xff]
  %v73 = vpack.c.bf16 %v46, %v45
  %v74 = vpack.c.bf16 %v48, %v47
  %v75 = vpack.c.bf16 %v50, %v49
  %v76 = vpack.c.bf16 %v52, %v51
  %v77 = vpack.c.bf16 %v54, %v53
  %v78 = vpack.c.bf16 %v56, %v55
  %v79 = vpack.c.bf16 %v58, %v57
  %v80 = vpack.c.bf16 %v60, %v59
  %v81 = vpack.c.bf16 %v62, %v61
  %v82 = vpack.c.bf16 %v64, %v63
  %v83 = vpack.c.bf16 %v66, %v65
  %v84 = vpack.c.bf16 %v68, %v67
  %v85 = vpack.c.bf16 %v70, %v69
  %v86 = vld [vmem:[%s1] sm:$0xf]
  %v87 = vld [vmem:[%s1 + $0x4] sm:$0xf]
  %v88 = vld [vmem:[%s1 + $0x8] sm:$0xf]
  %v89 = vld [vmem:[%s1 + $0xc] sm:$0x3]
  %v90 = vld [vmem:[%s2] sm:$0xf]
  %v91 = vld [vmem:[%s2 + $0x4] sm:$0xf]
  %v92 = vld [vmem:[%s2 + $0x8] sm:$0xf]
  %v93 = vld [vmem:[%s2 + $0xc] sm:$0x3]
  %v94 = vpack.c.bf16 %v47, %v46
  %v95 = vpack.c.bf16 %v49, %v48
  %v96 = vpack.c.bf16 %v51, %v50
  %v97 = vpack.c.bf16 %v53, %v52
  %v98 = vpack.c.bf16 %v55, %v54
  %v99 = vpack.c.bf16 %v57, %v56
  %v100 = vpack.c.bf16 %v59, %v58
  %v101 = vpack.c.bf16 %v61, %v60
  %v102 = vpack.c.bf16 %v63, %v62
  %v103 = vpack.c.bf16 %v65, %v64
  %v104 = vpack.c.bf16 %v67, %v66
  %v105 = vpack.c.bf16 %v69, %v68
  %v106 = vpack.c.bf16 %v71, %v70
  %s107 = scalar_lea.vmem %s1, 16
  %v108 = vld [vmem:[%s107] sm:$0xf]
  %v109 = vld [vmem:[%s107 + $0x4] sm:$0xf]
  %v110 = vld [vmem:[%s107 + $0x8] sm:$0xf]
  %v111 = vld [vmem:[%s107 + $0xc] sm:$0x3]
  %v116 = vunpack.c.l.b16 %v108
  %v117 = vunpack.c.l.b16 %v109
  %v118 = vunpack.c.l.b16 %v110
  %v119 = vunpack.c.l.b16 %v111
  %v120 = vpack.c.b16 %v117, %v116
  %v121 = vpack.c.b16 %v119, %v118
  %vm123 = vcmask 228352
  %v125 = vsel %vm123, %v94, 0
  %v128 = vsel %vm123, %v95, 0
  %v131 = vsel %vm123, %v96, 0
  %v134 = vsel %vm123, %v97, 0
  %v137 = vsel %vm123, %v98, 0
  %v140 = vsel %vm123, %v99, 0
  %v143 = vsel %vm123, %v100, 0
  %v146 = vsel %vm123, %v101, 0
  %v149 = vsel %vm123, %v102, 0
  %v152 = vsel %vm123, %v103, 0
  %v155 = vsel %vm123, %v104, 0
  %v158 = vsel %vm123, %v105, 0
  %v161 = vsel %vm123, %v106, 0
  %vm163 = vcmask 1045504
  %v165 = vsel %vm163, %v121, 0
  %167 = vmatpush.bf16.msra.mxu0 0
  %168 = vmatpush.bf16.msra.mxu0 0
  %169 = vmatpush.bf16.msra.mxu0 0
  %170 = vmatpush.bf16.msra.mxu0 0
  %171 = vmatpush.bf16.msra.mxu0 0
  %172 = vmatpush.bf16.msra.mxu0 0
  %173 = vmatpush.bf16.msra.mxu0 %v165
  %174 = vmatpush.bf16.msra.mxu0 %v120
  %175 = vmatmul.bf16.gmra.mxu0 %v125
  %v176 = vpop.f32.mrf.mxu0
  %v177 = vadd.f32 0.0, %v176
  %v178 = vpop.f32.mrf.mxu0
  %v179 = vadd.f32 0.0, %v178
  %180 = vmatmul.bf16.gmra.mxu0 %v128
  %v181 = vpop.f32.mrf.mxu0
  %v182 = vadd.f32 0.0, %v181
  %v183 = vpop.f32.mrf.mxu0
  %v184 = vadd.f32 0.0, %v183
  %185 = vmatmul.bf16.gmra.mxu0 %v131
  %v186 = vpop.f32.mrf.mxu0
  %v187 = vadd.f32 0.0, %v186
  %v188 = vpop.f32.mrf.mxu0
  %v189 = vadd.f32 0.0, %v188
  %190 = vmatmul.bf16.gmra.mxu0 %v134
  %v191 = vpop.f32.mrf.mxu0
  %v192 = vadd.f32 0.0, %v191
  %v193 = vpop.f32.mrf.mxu0
  %v194 = vadd.f32 0.0, %v193
  %195 = vmatmul.bf16.gmra.mxu0 %v137
  %v196 = vpop.f32.mrf.mxu0
  %v197 = vadd.f32 0.0, %v196
  %v198 = vpop.f32.mrf.mxu0
  %v199 = vadd.f32 0.0, %v198
  %200 = vmatmul.bf16.gmra.mxu0 %v140
  %v201 = vpop.f32.mrf.mxu0
  %v202 = vadd.f32 0.0, %v201
  %v203 = vpop.f32.mrf.mxu0
  %v204 = vadd.f32 0.0, %v203
  %205 = vmatmul.bf16.gmra.mxu0 %v143
  %v206 = vpop.f32.mrf.mxu0
  %v207 = vadd.f32 0.0, %v206
  %v208 = vpop.f32.mrf.mxu0
  %v209 = vadd.f32 0.0, %v208
  %210 = vmatmul.bf16.gmra.mxu0 %v146
  %v211 = vpop.f32.mrf.mxu0
  %v212 = vadd.f32 0.0, %v211
  %v213 = vpop.f32.mrf.mxu0
  %v214 = vadd.f32 0.0, %v213
  %215 = vmatmul.bf16.gmra.mxu0 %v149
  %v216 = vpop.f32.mrf.mxu0
  %v217 = vadd.f32 0.0, %v216
  %v218 = vpop.f32.mrf.mxu0
  %v219 = vadd.f32 0.0, %v218
  %220 = vmatmul.bf16.gmra.mxu0 %v152
  %v221 = vpop.f32.mrf.mxu0
  %v222 = vadd.f32 0.0, %v221
  %v223 = vpop.f32.mrf.mxu0
  %v224 = vadd.f32 0.0, %v223
  %225 = vmatmul.bf16.gmra.mxu0 %v155
  %v226 = vpop.f32.mrf.mxu0
  %v227 = vadd.f32 0.0, %v226
  %v228 = vpop.f32.mrf.mxu0
  %v229 = vadd.f32 0.0, %v228
  %230 = vmatmul.bf16.gmra.mxu0 %v158
  %v231 = vpop.f32.mrf.mxu0
  %v232 = vadd.f32 0.0, %v231
  %v233 = vpop.f32.mrf.mxu0
  %v234 = vadd.f32 0.0, %v233
  %235 = vmatmul.bf16.gmra.mxu0 %v161
  %v236 = vpop.f32.mrf.mxu0
  %v237 = vadd.f32 0.0, %v236
  %v238 = vpop.f32.mrf.mxu0
  %v239 = vadd.f32 0.0, %v238
  %240 = vdwg.mxu0
  %v245 = vunpack.c.l.b16 %v86
  %v246 = vunpack.c.l.b16 %v87
  %v247 = vunpack.c.l.b16 %v88
  %v248 = vunpack.c.l.b16 %v89
  %v249 = vpack.c.b16 %v246, %v245
  %v250 = vpack.c.b16 %v248, %v247
  %v253 = vsel %vm123, %v73, 0
  %v256 = vsel %vm123, %v74, 0
  %v259 = vsel %vm123, %v75, 0
  %v262 = vsel %vm123, %v76, 0
  %v265 = vsel %vm123, %v77, 0
  %v268 = vsel %vm123, %v78, 0
  %v271 = vsel %vm123, %v79, 0
  %v274 = vsel %vm123, %v80, 0
  %v277 = vsel %vm123, %v81, 0
  %v280 = vsel %vm123, %v82, 0
  %v283 = vsel %vm123, %v83, 0
  %v286 = vsel %vm123, %v84, 0
  %v289 = vsel %vm123, %v85, 0
  %v292 = vsel %vm163, %v250, 0
  %294 = vmatpush.bf16.msra.mxu0 0
  %295 = vmatpush.bf16.msra.mxu0 0
  %296 = vmatpush.bf16.msra.mxu0 0
  %297 = vmatpush.bf16.msra.mxu0 0
  %298 = vmatpush.bf16.msra.mxu0 0
  %299 = vmatpush.bf16.msra.mxu0 0
  %300 = vmatpush.bf16.msra.mxu0 %v292
  %301 = vmatpush.bf16.msra.mxu0 %v249
  %302 = vmatmul.bf16.gmra.mxu0 %v253
  %v303 = vpop.f32.mrf.mxu0
  %v304 = vadd.f32 %v177, %v303
  %v305 = vpop.f32.mrf.mxu0
  %v306 = vadd.f32 %v179, %v305
  %307 = vmatmul.bf16.gmra.mxu0 %v256
  %v308 = vpop.f32.mrf.mxu0
  %v309 = vadd.f32 %v182, %v308
  %v310 = vpop.f32.mrf.mxu0
  %v311 = vadd.f32 %v184, %v310
  %312 = vmatmul.bf16.gmra.mxu0 %v259
  %v313 = vpop.f32.mrf.mxu0
  %v314 = vadd.f32 %v187, %v313
  %v315 = vpop.f32.mrf.mxu0
  %v316 = vadd.f32 %v189, %v315
  %317 = vmatmul.bf16.gmra.mxu0 %v262
  %v318 = vpop.f32.mrf.mxu0
  %v319 = vadd.f32 %v192, %v318
  %v320 = vpop.f32.mrf.mxu0
  %v321 = vadd.f32 %v194, %v320
  %322 = vmatmul.bf16.gmra.mxu0 %v265
  %v323 = vpop.f32.mrf.mxu0
  %v324 = vadd.f32 %v197, %v323
  %v325 = vpop.f32.mrf.mxu0
  %v326 = vadd.f32 %v199, %v325
  %327 = vmatmul.bf16.gmra.mxu0 %v268
  %v328 = vpop.f32.mrf.mxu0
  %v329 = vadd.f32 %v202, %v328
  %v330 = vpop.f32.mrf.mxu0
  %v331 = vadd.f32 %v204, %v330
  %332 = vmatmul.bf16.gmra.mxu0 %v271
  %v333 = vpop.f32.mrf.mxu0
  %v334 = vadd.f32 %v207, %v333
  %v335 = vpop.f32.mrf.mxu0
  %v336 = vadd.f32 %v209, %v335
  %337 = vmatmul.bf16.gmra.mxu0 %v274
  %v338 = vpop.f32.mrf.mxu0
  %v339 = vadd.f32 %v212, %v338
  %v340 = vpop.f32.mrf.mxu0
  %v341 = vadd.f32 %v214, %v340
  %342 = vmatmul.bf16.gmra.mxu0 %v277
  %v343 = vpop.f32.mrf.mxu0
  %v344 = vadd.f32 %v217, %v343
  %v345 = vpop.f32.mrf.mxu0
  %v346 = vadd.f32 %v219, %v345
  %347 = vmatmul.bf16.gmra.mxu0 %v280
  %v348 = vpop.f32.mrf.mxu0
  %v349 = vadd.f32 %v222, %v348
  %v350 = vpop.f32.mrf.mxu0
  %v351 = vadd.f32 %v224, %v350
  %352 = vmatmul.bf16.gmra.mxu0 %v283
  %v353 = vpop.f32.mrf.mxu0
  %v354 = vadd.f32 %v227, %v353
  %v355 = vpop.f32.mrf.mxu0
  %v356 = vadd.f32 %v229, %v355
  %357 = vmatmul.bf16.gmra.mxu0 %v286
  %v358 = vpop.f32.mrf.mxu0
  %v359 = vadd.f32 %v232, %v358
  %v360 = vpop.f32.mrf.mxu0
  %v361 = vadd.f32 %v234, %v360
  %362 = vmatmul.bf16.gmra.mxu0 %v289
  %v363 = vpop.f32.mrf.mxu0
  %v364 = vadd.f32 %v237, %v363
  %v365 = vpop.f32.mrf.mxu0
  %v366 = vadd.f32 %v239, %v365
  %367 = vdwg.mxu0
  %s368 = scalar_lea.vmem %s2, 16
  %v369 = vld [vmem:[%s368] sm:$0xf]
  %v370 = vld [vmem:[%s368 + $0x4] sm:$0xf]
  %v371 = vld [vmem:[%s368 + $0x8] sm:$0xf]
  %v372 = vld [vmem:[%s368 + $0xc] sm:$0x3]
  %v377 = vunpack.c.l.b16 %v369
  %v378 = vunpack.c.l.b16 %v370
  %v379 = vunpack.c.l.b16 %v371
  %v380 = vunpack.c.l.b16 %v372
  %v381 = vpack.c.b16 %v378, %v377
  %v382 = vpack.c.b16 %v380, %v379
  %v385 = vsel %vm163, %v382, 0
  %387 = vmatpush.bf16.msra.mxu0 0
  %388 = vmatpush.bf16.msra.mxu0 0
  %389 = vmatpush.bf16.msra.mxu0 0
  %390 = vmatpush.bf16.msra.mxu0 0
  %391 = vmatpush.bf16.msra.mxu0 0
  %392 = vmatpush.bf16.msra.mxu0 0
  %393 = vmatpush.bf16.msra.mxu0 %v385
  %394 = vmatpush.bf16.msra.mxu0 %v381
  %395 = vmatmul.bf16.gmra.mxu0 %v125
  %v396 = vpop.f32.mrf.mxu0
  %v397 = vadd.f32 0.0, %v396
  %v398 = vpop.f32.mrf.mxu0
  %v399 = vadd.f32 0.0, %v398
  %400 = vmatmul.bf16.gmra.mxu0 %v128
  %v401 = vpop.f32.mrf.mxu0
  %v402 = vadd.f32 0.0, %v401
  %v403 = vpop.f32.mrf.mxu0
  %v404 = vadd.f32 0.0, %v403
  %405 = vmatmul.bf16.gmra.mxu0 %v131
  %v406 = vpop.f32.mrf.mxu0
  %v407 = vadd.f32 0.0, %v406
  %v408 = vpop.f32.mrf.mxu0
  %v409 = vadd.f32 0.0, %v408
  %410 = vmatmul.bf16.gmra.mxu0 %v134
  %v411 = vpop.f32.mrf.mxu0
  %v412 = vadd.f32 0.0, %v411
  %v413 = vpop.f32.mrf.mxu0
  %v414 = vadd.f32 0.0, %v413
  %415 = vmatmul.bf16.gmra.mxu0 %v137
  %v416 = vpop.f32.mrf.mxu0
  %v417 = vadd.f32 0.0, %v416
  %v418 = vpop.f32.mrf.mxu0
  %v419 = vadd.f32 0.0, %v418
  %420 = vmatmul.bf16.gmra.mxu0 %v140
  %v421 = vpop.f32.mrf.mxu0
  %v422 = vadd.f32 0.0, %v421
  %v423 = vpop.f32.mrf.mxu0
  %v424 = vadd.f32 0.0, %v423
  %425 = vmatmul.bf16.gmra.mxu0 %v143
  %v426 = vpop.f32.mrf.mxu0
  %v427 = vadd.f32 0.0, %v426
  %v428 = vpop.f32.mrf.mxu0
  %v429 = vadd.f32 0.0, %v428
  %430 = vmatmul.bf16.gmra.mxu0 %v146
  %v431 = vpop.f32.mrf.mxu0
  %v432 = vadd.f32 0.0, %v431
  %v433 = vpop.f32.mrf.mxu0
  %v434 = vadd.f32 0.0, %v433
  %435 = vmatmul.bf16.gmra.mxu0 %v149
  %v436 = vpop.f32.mrf.mxu0
  %v437 = vadd.f32 0.0, %v436
  %v438 = vpop.f32.mrf.mxu0
  %v439 = vadd.f32 0.0, %v438
  %440 = vmatmul.bf16.gmra.mxu0 %v152
  %v441 = vpop.f32.mrf.mxu0
  %v442 = vadd.f32 0.0, %v441
  %v443 = vpop.f32.mrf.mxu0
  %v444 = vadd.f32 0.0, %v443
  %445 = vmatmul.bf16.gmra.mxu0 %v155
  %v446 = vpop.f32.mrf.mxu0
  %v447 = vadd.f32 0.0, %v446
  %v448 = vpop.f32.mrf.mxu0
  %v449 = vadd.f32 0.0, %v448
  %450 = vmatmul.bf16.gmra.mxu0 %v158
  %v451 = vpop.f32.mrf.mxu0
  %v452 = vadd.f32 0.0, %v451
  %v453 = vpop.f32.mrf.mxu0
  %v454 = vadd.f32 0.0, %v453
  %455 = vmatmul.bf16.gmra.mxu0 %v161
  %v456 = vpop.f32.mrf.mxu0
  %v457 = vadd.f32 0.0, %v456
  %v458 = vpop.f32.mrf.mxu0
  %v459 = vadd.f32 0.0, %v458
  %460 = vdwg.mxu0
  %v465 = vunpack.c.l.b16 %v90
  %v466 = vunpack.c.l.b16 %v91
  %v467 = vunpack.c.l.b16 %v92
  %v468 = vunpack.c.l.b16 %v93
  %v469 = vpack.c.b16 %v466, %v465
  %v470 = vpack.c.b16 %v468, %v467
  %v473 = vsel %vm163, %v470, 0
  %475 = vmatpush.bf16.msra.mxu0 0
  %476 = vmatpush.bf16.msra.mxu0 0
  %477 = vmatpush.bf16.msra.mxu0 0
  %478 = vmatpush.bf16.msra.mxu0 0
  %479 = vmatpush.bf16.msra.mxu0 0
  %480 = vmatpush.bf16.msra.mxu0 0
  %481 = vmatpush.bf16.msra.mxu0 %v473
  %482 = vmatpush.bf16.msra.mxu0 %v469
  %483 = vmatmul.bf16.gmra.mxu0 %v253
  %v484 = vpop.f32.mrf.mxu0
  %v485 = vadd.f32 %v397, %v484
  %v486 = vpop.f32.mrf.mxu0
  %v487 = vadd.f32 %v399, %v486
  %488 = vmatmul.bf16.gmra.mxu0 %v256
  %v489 = vpop.f32.mrf.mxu0
  %v490 = vadd.f32 %v402, %v489
  %v491 = vpop.f32.mrf.mxu0
  %v492 = vadd.f32 %v404, %v491
  %493 = vmatmul.bf16.gmra.mxu0 %v259
  %v494 = vpop.f32.mrf.mxu0
  %v495 = vadd.f32 %v407, %v494
  %v496 = vpop.f32.mrf.mxu0
  %v497 = vadd.f32 %v409, %v496
  %498 = vmatmul.bf16.gmra.mxu0 %v262
  %v499 = vpop.f32.mrf.mxu0
  %v500 = vadd.f32 %v412, %v499
  %v501 = vpop.f32.mrf.mxu0
  %v502 = vadd.f32 %v414, %v501
  %503 = vmatmul.bf16.gmra.mxu0 %v265
  %v504 = vpop.f32.mrf.mxu0
  %v505 = vadd.f32 %v417, %v504
  %v506 = vpop.f32.mrf.mxu0
  %v507 = vadd.f32 %v419, %v506
  %508 = vmatmul.bf16.gmra.mxu0 %v268
  %v509 = vpop.f32.mrf.mxu0
  %v510 = vadd.f32 %v422, %v509
  %v511 = vpop.f32.mrf.mxu0
  %v512 = vadd.f32 %v424, %v511
  %513 = vmatmul.bf16.gmra.mxu0 %v271
  %v514 = vpop.f32.mrf.mxu0
  %v515 = vadd.f32 %v427, %v514
  %v516 = vpop.f32.mrf.mxu0
  %v517 = vadd.f32 %v429, %v516
  %518 = vmatmul.bf16.gmra.mxu0 %v274
  %v519 = vpop.f32.mrf.mxu0
  %v520 = vadd.f32 %v432, %v519
  %v521 = vpop.f32.mrf.mxu0
  %v522 = vadd.f32 %v434, %v521
  %523 = vmatmul.bf16.gmra.mxu0 %v277
  %v524 = vpop.f32.mrf.mxu0
  %v525 = vadd.f32 %v437, %v524
  %v526 = vpop.f32.mrf.mxu0
  %v527 = vadd.f32 %v439, %v526
  %528 = vmatmul.bf16.gmra.mxu0 %v280
  %v529 = vpop.f32.mrf.mxu0
  %v530 = vadd.f32 %v442, %v529
  %v531 = vpop.f32.mrf.mxu0
  %v532 = vadd.f32 %v444, %v531
  %533 = vmatmul.bf16.gmra.mxu0 %v283
  %v534 = vpop.f32.mrf.mxu0
  %v535 = vadd.f32 %v447, %v534
  %v536 = vpop.f32.mrf.mxu0
  %v537 = vadd.f32 %v449, %v536
  %538 = vmatmul.bf16.gmra.mxu0 %v286
  %v539 = vpop.f32.mrf.mxu0
  %v540 = vadd.f32 %v452, %v539
  %v541 = vpop.f32.mrf.mxu0
  %v542 = vadd.f32 %v454, %v541
  %543 = vmatmul.bf16.gmra.mxu0 %v289
  %v544 = vpop.f32.mrf.mxu0
  %v545 = vadd.f32 %v457, %v544
  %v546 = vpop.f32.mrf.mxu0
  %v547 = vadd.f32 %v459, %v546
  %548 = vdwg.mxu0
  %v549 = vpack.c.bf16 %v72, %v71
  %s550 = scalar_lea.vmem %s1, 32
  %v551 = vld [vmem:[%s550] sm:$0xf]
  %v552 = vld [vmem:[%s550 + $0x4] sm:$0xf]
  %v553 = vld [vmem:[%s550 + $0x8] sm:$0xf]
  %v554 = vld [vmem:[%s550 + $0xc] sm:$0x3]
  %v559 = vunpack.c.l.b16 %v551
  %v560 = vunpack.c.l.b16 %v552
  %v561 = vunpack.c.l.b16 %v553
  %v562 = vunpack.c.l.b16 %v554
  %v563 = vpack.c.b16 %v560, %v559
  %v564 = vpack.c.b16 %v562, %v561
  %v567 = vsel %vm123, %v549, 0
  %v570 = vsel %vm163, %v564, 0
  %572 = vmatpush.bf16.msra.mxu0 0
  %573 = vmatpush.bf16.msra.mxu0 0
  %574 = vmatpush.bf16.msra.mxu0 0
  %575 = vmatpush.bf16.msra.mxu0 0
  %576 = vmatpush.bf16.msra.mxu0 0
  %577 = vmatpush.bf16.msra.mxu0 0
  %578 = vmatpush.bf16.msra.mxu0 %v570
  %579 = vmatpush.bf16.msra.mxu0 %v563
  %580 = vmatmul.bf16.gmra.mxu0 %v256
  %v581 = vpop.f32.mrf.mxu0
  %v582 = vadd.f32 0.0, %v581
  %v583 = vpop.f32.mrf.mxu0
  %v584 = vadd.f32 0.0, %v583
  %585 = vmatmul.bf16.gmra.mxu0 %v259
  %v586 = vpop.f32.mrf.mxu0
  %v587 = vadd.f32 0.0, %v586
  %v588 = vpop.f32.mrf.mxu0
  %v589 = vadd.f32 0.0, %v588
  %590 = vmatmul.bf16.gmra.mxu0 %v262
  %v591 = vpop.f32.mrf.mxu0
  %v592 = vadd.f32 0.0, %v591
  %v593 = vpop.f32.mrf.mxu0
  %v594 = vadd.f32 0.0, %v593
  %595 = vmatmul.bf16.gmra.mxu0 %v265
  %v596 = vpop.f32.mrf.mxu0
  %v597 = vadd.f32 0.0, %v596
  %v598 = vpop.f32.mrf.mxu0
  %v599 = vadd.f32 0.0, %v598
  %600 = vmatmul.bf16.gmra.mxu0 %v268
  %v601 = vpop.f32.mrf.mxu0
  %v602 = vadd.f32 0.0, %v601
  %v603 = vpop.f32.mrf.mxu0
  %v604 = vadd.f32 0.0, %v603
  %605 = vmatmul.bf16.gmra.mxu0 %v271
  %v606 = vpop.f32.mrf.mxu0
  %v607 = vadd.f32 0.0, %v606
  %v608 = vpop.f32.mrf.mxu0
  %v609 = vadd.f32 0.0, %v608
  %610 = vmatmul.bf16.gmra.mxu0 %v274
  %v611 = vpop.f32.mrf.mxu0
  %v612 = vadd.f32 0.0, %v611
  %v613 = vpop.f32.mrf.mxu0
  %v614 = vadd.f32 0.0, %v613
  %615 = vmatmul.bf16.gmra.mxu0 %v277
  %v616 = vpop.f32.mrf.mxu0
  %v617 = vadd.f32 0.0, %v616
  %v618 = vpop.f32.mrf.mxu0
  %v619 = vadd.f32 0.0, %v618
  %620 = vmatmul.bf16.gmra.mxu0 %v280
  %v621 = vpop.f32.mrf.mxu0
  %v622 = vadd.f32 0.0, %v621
  %v623 = vpop.f32.mrf.mxu0
  %v624 = vadd.f32 0.0, %v623
  %625 = vmatmul.bf16.gmra.mxu0 %v283
  %v626 = vpop.f32.mrf.mxu0
  %v627 = vadd.f32 0.0, %v626
  %v628 = vpop.f32.mrf.mxu0
  %v629 = vadd.f32 0.0, %v628
  %630 = vmatmul.bf16.gmra.mxu0 %v286
  %v631 = vpop.f32.mrf.mxu0
  %v632 = vadd.f32 0.0, %v631
  %v633 = vpop.f32.mrf.mxu0
  %v634 = vadd.f32 0.0, %v633
  %635 = vmatmul.bf16.gmra.mxu0 %v289
  %v636 = vpop.f32.mrf.mxu0
  %v637 = vadd.f32 0.0, %v636
  %v638 = vpop.f32.mrf.mxu0
  %v639 = vadd.f32 0.0, %v638
  %640 = vmatmul.bf16.gmra.mxu0 %v567
  %v641 = vpop.f32.mrf.mxu0
  %v642 = vadd.f32 0.0, %v641
  %v643 = vpop.f32.mrf.mxu0
  %v644 = vadd.f32 0.0, %v643
  %645 = vdwg.mxu0
  %v646 = vadd.f32 %v304, %v582
  %v647 = vadd.f32 %v306, %v584
  %v648 = vadd.f32 %v309, %v587
  %v649 = vadd.f32 %v311, %v589
  %v650 = vadd.f32 %v314, %v592
  %v651 = vadd.f32 %v316, %v594
  %v652 = vadd.f32 %v319, %v597
  %v653 = vadd.f32 %v321, %v599
  %v654 = vadd.f32 %v324, %v602
  %v655 = vadd.f32 %v326, %v604
  %v656 = vadd.f32 %v329, %v607
  %v657 = vadd.f32 %v331, %v609
  %v658 = vadd.f32 %v334, %v612
  %v659 = vadd.f32 %v336, %v614
  %v660 = vadd.f32 %v339, %v617
  %v661 = vadd.f32 %v341, %v619
  %v662 = vadd.f32 %v344, %v622
  %v663 = vadd.f32 %v346, %v624
  %v664 = vadd.f32 %v349, %v627
  %v665 = vadd.f32 %v351, %v629
  %v666 = vadd.f32 %v354, %v632
  %v667 = vadd.f32 %v356, %v634
  %v668 = vadd.f32 %v359, %v637
  %v669 = vadd.f32 %v361, %v639
  %v670 = vadd.f32 %v364, %v642
  %v671 = vadd.f32 %v366, %v644
  %s672 = scalar_lea.vmem %s2, 32
  %v673 = vld [vmem:[%s672] sm:$0xf]
  %v674 = vld [vmem:[%s672 + $0x4] sm:$0xf]
  %v675 = vld [vmem:[%s672 + $0x8] sm:$0xf]
  %v676 = vld [vmem:[%s672 + $0xc] sm:$0x3]
  %v681 = vunpack.c.l.b16 %v673
  %v682 = vunpack.c.l.b16 %v674
  %v683 = vunpack.c.l.b16 %v675
  %v684 = vunpack.c.l.b16 %v676
  %v685 = vpack.c.b16 %v682, %v681
  %v686 = vpack.c.b16 %v684, %v683
  %v689 = vsel %vm163, %v686, 0
  %691 = vmatpush.bf16.msra.mxu0 0
  %692 = vmatpush.bf16.msra.mxu0 0
  %693 = vmatpush.bf16.msra.mxu0 0
  %694 = vmatpush.bf16.msra.mxu0 0
  %695 = vmatpush.bf16.msra.mxu0 0
  %696 = vmatpush.bf16.msra.mxu0 0
  %697 = vmatpush.bf16.msra.mxu0 %v689
  %698 = vmatpush.bf16.msra.mxu0 %v685
  %699 = vmatmul.bf16.gmra.mxu0 %v256
  %v700 = vpop.f32.mrf.mxu0
  %v701 = vadd.f32 0.0, %v700
  %v702 = vpop.f32.mrf.mxu0
  %v703 = vadd.f32 0.0, %v702
  %704 = vmatmul.bf16.gmra.mxu0 %v259
  %v705 = vpop.f32.mrf.mxu0
  %v706 = vadd.f32 0.0, %v705
  %v707 = vpop.f32.mrf.mxu0
  %v708 = vadd.f32 0.0, %v707
  %709 = vmatmul.bf16.gmra.mxu0 %v262
  %v710 = vpop.f32.mrf.mxu0
  %v711 = vadd.f32 0.0, %v710
  %v712 = vpop.f32.mrf.mxu0
  %v713 = vadd.f32 0.0, %v712
  %714 = vmatmul.bf16.gmra.mxu0 %v265
  %v715 = vpop.f32.mrf.mxu0
  %v716 = vadd.f32 0.0, %v715
  %v717 = vpop.f32.mrf.mxu0
  %v718 = vadd.f32 0.0, %v717
  %719 = vmatmul.bf16.gmra.mxu0 %v268
  %v720 = vpop.f32.mrf.mxu0
  %v721 = vadd.f32 0.0, %v720
  %v722 = vpop.f32.mrf.mxu0
  %v723 = vadd.f32 0.0, %v722
  %724 = vmatmul.bf16.gmra.mxu0 %v271
  %v725 = vpop.f32.mrf.mxu0
  %v726 = vadd.f32 0.0, %v725
  %v727 = vpop.f32.mrf.mxu0
  %v728 = vadd.f32 0.0, %v727
  %729 = vmatmul.bf16.gmra.mxu0 %v274
  %v730 = vpop.f32.mrf.mxu0
  %v731 = vadd.f32 0.0, %v730
  %v732 = vpop.f32.mrf.mxu0
  %v733 = vadd.f32 0.0, %v732
  %734 = vmatmul.bf16.gmra.mxu0 %v277
  %v735 = vpop.f32.mrf.mxu0
  %v736 = vadd.f32 0.0, %v735
  %v737 = vpop.f32.mrf.mxu0
  %v738 = vadd.f32 0.0, %v737
  %739 = vmatmul.bf16.gmra.mxu0 %v280
  %v740 = vpop.f32.mrf.mxu0
  %v741 = vadd.f32 0.0, %v740
  %v742 = vpop.f32.mrf.mxu0
  %v743 = vadd.f32 0.0, %v742
  %744 = vmatmul.bf16.gmra.mxu0 %v283
  %v745 = vpop.f32.mrf.mxu0
  %v746 = vadd.f32 0.0, %v745
  %v747 = vpop.f32.mrf.mxu0
  %v748 = vadd.f32 0.0, %v747
  %749 = vmatmul.bf16.gmra.mxu0 %v286
  %v750 = vpop.f32.mrf.mxu0
  %v751 = vadd.f32 0.0, %v750
  %v752 = vpop.f32.mrf.mxu0
  %v753 = vadd.f32 0.0, %v752
  %754 = vmatmul.bf16.gmra.mxu0 %v289
  %v755 = vpop.f32.mrf.mxu0
  %v756 = vadd.f32 0.0, %v755
  %v757 = vpop.f32.mrf.mxu0
  %v758 = vadd.f32 0.0, %v757
  %759 = vmatmul.bf16.gmra.mxu0 %v567
  %v760 = vpop.f32.mrf.mxu0
  %v761 = vadd.f32 0.0, %v760
  %v762 = vpop.f32.mrf.mxu0
  %v763 = vadd.f32 0.0, %v762
  %764 = vdwg.mxu0
  %v765 = vadd.f32 %v485, %v701
  %v766 = vadd.f32 %v487, %v703
  %v767 = vadd.f32 %v490, %v706
  %v768 = vadd.f32 %v492, %v708
  %v769 = vadd.f32 %v495, %v711
  %v770 = vadd.f32 %v497, %v713
  %v771 = vadd.f32 %v500, %v716
  %v772 = vadd.f32 %v502, %v718
  %v773 = vadd.f32 %v505, %v721
  %v774 = vadd.f32 %v507, %v723
  %v775 = vadd.f32 %v510, %v726
  %v776 = vadd.f32 %v512, %v728
  %v777 = vadd.f32 %v515, %v731
  %v778 = vadd.f32 %v517, %v733
  %v779 = vadd.f32 %v520, %v736
  %v780 = vadd.f32 %v522, %v738
  %v781 = vadd.f32 %v525, %v741
  %v782 = vadd.f32 %v527, %v743
  %v783 = vadd.f32 %v530, %v746
  %v784 = vadd.f32 %v532, %v748
  %v785 = vadd.f32 %v535, %v751
  %v786 = vadd.f32 %v537, %v753
  %v787 = vadd.f32 %v540, %v756
  %v788 = vadd.f32 %v542, %v758
  %v789 = vadd.f32 %v545, %v761
  %v790 = vadd.f32 %v547, %v763
  %v791 = vmax.f32 %v646, %v765
  %v792 = vmax.f32 %v647, %v766
  %v793 = vmax.f32 %v648, %v767
  %v794 = vmax.f32 %v649, %v768
  %v795 = vmax.f32 %v650, %v769
  %v796 = vmax.f32 %v651, %v770
  %v797 = vmax.f32 %v652, %v771
  %v798 = vmax.f32 %v653, %v772
  %v799 = vmax.f32 %v654, %v773
  %v800 = vmax.f32 %v655, %v774
  %v801 = vmax.f32 %v656, %v775
  %v802 = vmax.f32 %v657, %v776
  %v803 = vmax.f32 %v658, %v777
  %v804 = vmax.f32 %v659, %v778
  %v805 = vmax.f32 %v660, %v779
  %v806 = vmax.f32 %v661, %v780
  %v807 = vmax.f32 %v662, %v781
  %v808 = vmax.f32 %v663, %v782
  %v809 = vmax.f32 %v664, %v783
  %v810 = vmax.f32 %v665, %v784
  %v811 = vmax.f32 %v666, %v785
  %v812 = vmax.f32 %v667, %v786
  %v813 = vmax.f32 %v668, %v787
  %v814 = vmax.f32 %v669, %v788
  %v815 = vmax.f32 %v670, %v789
  %v816 = vmax.f32 %v671, %v790
  %v817 = vld [vmem:[%s3] sm:$0x1]
  %v819 = vperm.slane %v817, 0
  %v821 = vadd.f32 %v791, %v819
  %v822 = vadd.f32 %v792, %v819
  %v823 = vadd.f32 %v793, %v819
  %v824 = vadd.f32 %v794, %v819
  %v825 = vadd.f32 %v795, %v819
  %v826 = vadd.f32 %v796, %v819
  %v827 = vadd.f32 %v797, %v819
  %v828 = vadd.f32 %v798, %v819
  %v829 = vadd.f32 %v799, %v819
  %v830 = vadd.f32 %v800, %v819
  %v831 = vadd.f32 %v801, %v819
  %v832 = vadd.f32 %v802, %v819
  %v833 = vadd.f32 %v803, %v819
  %v834 = vadd.f32 %v804, %v819
  %v835 = vadd.f32 %v805, %v819
  %v836 = vadd.f32 %v806, %v819
  %v837 = vadd.f32 %v807, %v819
  %v838 = vadd.f32 %v808, %v819
  %v839 = vadd.f32 %v809, %v819
  %v840 = vadd.f32 %v810, %v819
  %v841 = vadd.f32 %v811, %v819
  %v842 = vadd.f32 %v812, %v819
  %v843 = vadd.f32 %v813, %v819
  %v844 = vadd.f32 %v814, %v819
  %v845 = vadd.f32 %v815, %v819
  %v846 = vadd.f32 %v816, %v819
  %v847 = vmax.f32 %v821, 0.0
  %v848 = vmax.f32 %v822, 0.0
  %v849 = vmax.f32 %v823, 0.0
  %v850 = vmax.f32 %v824, 0.0
  %v851 = vmax.f32 %v825, 0.0
  %v852 = vmax.f32 %v826, 0.0
  %v853 = vmax.f32 %v827, 0.0
  %v854 = vmax.f32 %v828, 0.0
  %v855 = vmax.f32 %v829, 0.0
  %v856 = vmax.f32 %v830, 0.0
  %v857 = vmax.f32 %v831, 0.0
  %v858 = vmax.f32 %v832, 0.0
  %v859 = vmax.f32 %v833, 0.0
  %v860 = vmax.f32 %v834, 0.0
  %v861 = vmax.f32 %v835, 0.0
  %v862 = vmax.f32 %v836, 0.0
  %v863 = vmax.f32 %v837, 0.0
  %v864 = vmax.f32 %v838, 0.0
  %v865 = vmax.f32 %v839, 0.0
  %v866 = vmax.f32 %v840, 0.0
  %v867 = vmax.f32 %v841, 0.0
  %v868 = vmax.f32 %v842, 0.0
  %v869 = vmax.f32 %v843, 0.0
  %v870 = vmax.f32 %v844, 0.0
  %v871 = vmax.f32 %v845, 0.0
  %v872 = vmax.f32 %v846, 0.0
  %v873 = vmax.f32 %v847, %v848
  %v874 = vmax.f32 %v849, %v850
  %v875 = vmax.f32 %v851, %v852
  %v876 = vmax.f32 %v853, %v854
  %v877 = vmax.f32 %v855, %v856
  %v878 = vmax.f32 %v857, %v858
  %v879 = vmax.f32 %v859, %v860
  %v880 = vmax.f32 %v861, %v862
  %v881 = vmax.f32 %v863, %v864
  %v882 = vmax.f32 %v865, %v866
  %v883 = vmax.f32 %v867, %v868
  %v884 = vmax.f32 %v869, %v870
  %v885 = vmax.f32 %v871, %v872
  %v886 = vpack.c.bf16 %v874, %v873
  %v887 = vpack.c.bf16 %v876, %v875
  %v888 = vpack.c.bf16 %v878, %v877
  %v889 = vpack.c.bf16 %v880, %v879
  %v890 = vpack.c.bf16 %v881, %v881
  %v891 = vld [vmem:[%s4] sm:$0xf]
  %v892 = vld [vmem:[%s4 + $0x4] sm:$0xf]
  %v893 = vld [vmem:[%s4 + $0x8] sm:$0xf]
  %v894 = vld [vmem:[%s4 + $0xc] sm:$0xf]
  %v895 = vld [vmem:[%s4 + $0x10] sm:$0xf]
  %v896 = vld [vmem:[%s4 + $0x14] sm:$0xf]
  %v897 = vld [vmem:[%s4 + $0x18] sm:$0xf]
  %v898 = vld [vmem:[%s4 + $0x1c] sm:$0xf]
  %v899 = vld [vmem:[%s4 + $0x20] sm:$0xf]
  %v900 = vld [vmem:[%s4 + $0x24] sm:$0xf]
  %v901 = vld [vmem:[%s4 + $0x28] sm:$0xf]
  %v902 = vld [vmem:[%s4 + $0x2c] sm:$0xf]
  %v903 = vld [vmem:[%s4 + $0x30] sm:$0xf]
  %v904 = vld [vmem:[%s5] sm:$0xf]
  %v905 = vld [vmem:[%s5 + $0x4] sm:$0xf]
  %v906 = vld [vmem:[%s5 + $0x8] sm:$0xf]
  %v907 = vld [vmem:[%s5 + $0xc] sm:$0xf]
  %v908 = vld [vmem:[%s5 + $0x10] sm:$0xf]
  %v909 = vld [vmem:[%s5 + $0x14] sm:$0xf]
  %v910 = vld [vmem:[%s5 + $0x18] sm:$0xf]
  %v911 = vld [vmem:[%s5 + $0x1c] sm:$0xf]
  %v912 = vld [vmem:[%s5 + $0x20] sm:$0xf]
  %v913 = vld [vmem:[%s5 + $0x24] sm:$0xf]
  %v914 = vld [vmem:[%s5 + $0x28] sm:$0xf]
  %v915 = vld [vmem:[%s5 + $0x2c] sm:$0xf]
  %v916 = vld [vmem:[%s5 + $0x30] sm:$0xf]
  %v917 = vpack.c.bf16 %v875, %v874
  %v918 = vpack.c.bf16 %v877, %v876
  %v919 = vpack.c.bf16 %v879, %v878
  %v920 = vpack.c.bf16 %v881, %v880
  %v921 = vpack.c.bf16 %v882, %v882
  %s922 = scalar_lea.vmem %s4, 52
  %v923 = vld [vmem:[%s922] sm:$0xf]
  %v924 = vld [vmem:[%s922 + $0x4] sm:$0xf]
  %v925 = vld [vmem:[%s922 + $0x8] sm:$0xf]
  %v926 = vld [vmem:[%s922 + $0xc] sm:$0xf]
  %v927 = vld [vmem:[%s922 + $0x10] sm:$0xf]
  %v928 = vld [vmem:[%s922 + $0x14] sm:$0xf]
  %v929 = vld [vmem:[%s922 + $0x18] sm:$0xf]
  %v930 = vld [vmem:[%s922 + $0x1c] sm:$0xf]
  %v931 = vld [vmem:[%s922 + $0x20] sm:$0xf]
  %v932 = vld [vmem:[%s922 + $0x24] sm:$0xf]
  %v933 = vld [vmem:[%s922 + $0x28] sm:$0xf]
  %v934 = vld [vmem:[%s922 + $0x2c] sm:$0xf]
  %v935 = vld [vmem:[%s922 + $0x30] sm:$0xf]
  %v949 = vunpack.c.l.b16 %v923
  %v950 = vunpack.c.l.b16 %v924
  %v951 = vunpack.c.l.b16 %v925
  %v952 = vunpack.c.l.b16 %v926
  %v953 = vunpack.c.l.b16 %v927
  %v954 = vunpack.c.l.b16 %v928
  %v955 = vunpack.c.l.b16 %v929
  %v956 = vunpack.c.l.b16 %v930
  %v957 = vunpack.c.l.b16 %v931
  %v958 = vunpack.c.l.b16 %v932
  %v959 = vunpack.c.l.b16 %v933
  %v960 = vunpack.c.l.b16 %v934
  %v961 = vunpack.c.l.b16 %v935
  %v962 = vpack.c.b16 %v950, %v949
  %v963 = vpack.c.b16 %v952, %v951
  %v964 = vpack.c.b16 %v954, %v953
  %v965 = vpack.c.b16 %v956, %v955
  %v966 = vpack.c.b16 %v958, %v957
  %v967 = vpack.c.b16 %v960, %v959
  %v968 = vpack.c.b16 %v961, %v961
  %vm975 = vcmask 850944
  %v977 = vsel %vm975, %v917, 0
  %v980 = vsel %vm975, %v918, 0
  %v983 = vsel %vm975, %v919, 0
  %v986 = vsel %vm975, %v920, 0
  %v989 = vsel %vm975, %v921, 0
  %vm991 = vcmask 1043456
  %v993 = vsel %vm991, %v968, 0
  %995 = vmatpush.bf16.msra.mxu0 0
  %996 = vmatpush.bf16.msra.mxu0 %v993
  %997 = vmatpush.bf16.msra.mxu0 %v967
  %998 = vmatpush.bf16.msra.mxu0 %v966
  %999 = vmatpush.bf16.msra.mxu0 %v965
  %1000 = vmatpush.bf16.msra.mxu0 %v964
  %1001 = vmatpush.bf16.msra.mxu0 %v963
  %1002 = vmatpush.bf16.msra.mxu0 %v962
  %1003 = vmatmul.bf16.gmra.mxu0 %v977
  %v1004 = vpop.f32.mrf.mxu0
  %v1005 = vadd.f32 0.0, %v1004
  %v1006 = vpop.f32.mrf.mxu0
  %v1007 = vadd.f32 0.0, %v1006
  %1008 = vmatmul.bf16.gmra.mxu0 %v980
  %v1009 = vpop.f32.mrf.mxu0
  %v1010 = vadd.f32 0.0, %v1009
  %v1011 = vpop.f32.mrf.mxu0
  %v1012 = vadd.f32 0.0, %v1011
  %1013 = vmatmul.bf16.gmra.mxu0 %v983
  %v1014 = vpop.f32.mrf.mxu0
  %v1015 = vadd.f32 0.0, %v1014
  %v1016 = vpop.f32.mrf.mxu0
  %v1017 = vadd.f32 0.0, %v1016
  %1018 = vmatmul.bf16.gmra.mxu0 %v986
  %v1019 = vpop.f32.mrf.mxu0
  %v1020 = vadd.f32 0.0, %v1019
  %v1021 = vpop.f32.mrf.mxu0
  %v1022 = vadd.f32 0.0, %v1021
  %1023 = vmatmul.bf16.gmra.mxu0 %v989
  %v1024 = vpop.f32.mrf.mxu0
  %v1025 = vpop.f32.mrf.mxu0
  %1026 = vdwg.mxu0
  %v1040 = vunpack.c.l.b16 %v891
  %v1041 = vunpack.c.l.b16 %v892
  %v1042 = vunpack.c.l.b16 %v893
  %v1043 = vunpack.c.l.b16 %v894
  %v1044 = vunpack.c.l.b16 %v895
  %v1045 = vunpack.c.l.b16 %v896
  %v1046 = vunpack.c.l.b16 %v897
  %v1047 = vunpack.c.l.b16 %v898
  %v1048 = vunpack.c.l.b16 %v899
  %v1049 = vunpack.c.l.b16 %v900
  %v1050 = vunpack.c.l.b16 %v901
  %v1051 = vunpack.c.l.b16 %v902
  %v1052 = vunpack.c.l.b16 %v903
  %v1053 = vpack.c.b16 %v1041, %v1040
  %v1054 = vpack.c.b16 %v1043, %v1042
  %v1055 = vpack.c.b16 %v1045, %v1044
  %v1056 = vpack.c.b16 %v1047, %v1046
  %v1057 = vpack.c.b16 %v1049, %v1048
  %v1058 = vpack.c.b16 %v1051, %v1050
  %v1059 = vpack.c.b16 %v1052, %v1052
  %v1067 = vsel %vm975, %v886, 0
  %v1070 = vsel %vm975, %v887, 0
  %v1073 = vsel %vm975, %v888, 0
  %v1076 = vsel %vm975, %v889, 0
  %v1079 = vsel %vm975, %v890, 0
  %v1082 = vsel %vm991, %v1059, 0
  %1084 = vmatpush.bf16.msra.mxu0 0
  %1085 = vmatpush.bf16.msra.mxu0 %v1082
  %1086 = vmatpush.bf16.msra.mxu0 %v1058
  %1087 = vmatpush.bf16.msra.mxu0 %v1057
  %1088 = vmatpush.bf16.msra.mxu0 %v1056
  %1089 = vmatpush.bf16.msra.mxu0 %v1055
  %1090 = vmatpush.bf16.msra.mxu0 %v1054
  %1091 = vmatpush.bf16.msra.mxu0 %v1053
  %1092 = vmatmul.bf16.gmra.mxu0 %v1067
  %v1093 = vpop.f32.mrf.mxu0
  %v1094 = vadd.f32 %v1005, %v1093
  %v1095 = vpop.f32.mrf.mxu0
  %v1096 = vadd.f32 %v1007, %v1095
  %1097 = vmatmul.bf16.gmra.mxu0 %v1070
  %v1098 = vpop.f32.mrf.mxu0
  %v1099 = vadd.f32 %v1010, %v1098
  %v1100 = vpop.f32.mrf.mxu0
  %v1101 = vadd.f32 %v1012, %v1100
  %1102 = vmatmul.bf16.gmra.mxu0 %v1073
  %v1103 = vpop.f32.mrf.mxu0
  %v1104 = vadd.f32 %v1015, %v1103
  %v1105 = vpop.f32.mrf.mxu0
  %v1106 = vadd.f32 %v1017, %v1105
  %1107 = vmatmul.bf16.gmra.mxu0 %v1076
  %v1108 = vpop.f32.mrf.mxu0
  %v1109 = vadd.f32 %v1020, %v1108
  %v1110 = vpop.f32.mrf.mxu0
  %v1111 = vadd.f32 %v1022, %v1110
  %1112 = vmatmul.bf16.gmra.mxu0 %v1079
  %v1113 = vpop.f32.mrf.mxu0
  %v1114 = vpop.f32.mrf.mxu0
  %1115 = vdwg.mxu0
  %s1116 = scalar_lea.vmem %s5, 52
  %v1117 = vld [vmem:[%s1116] sm:$0xf]
  %v1118 = vld [vmem:[%s1116 + $0x4] sm:$0xf]
  %v1119 = vld [vmem:[%s1116 + $0x8] sm:$0xf]
  %v1120 = vld [vmem:[%s1116 + $0xc] sm:$0xf]
  %v1121 = vld [vmem:[%s1116 + $0x10] sm:$0xf]
  %v1122 = vld [vmem:[%s1116 + $0x14] sm:$0xf]
  %v1123 = vld [vmem:[%s1116 + $0x18] sm:$0xf]
  %v1124 = vld [vmem:[%s1116 + $0x1c] sm:$0xf]
  %v1125 = vld [vmem:[%s1116 + $0x20] sm:$0xf]
  %v1126 = vld [vmem:[%s1116 + $0x24] sm:$0xf]
  %v1127 = vld [vmem:[%s1116 + $0x28] sm:$0xf]
  %v1128 = vld [vmem:[%s1116 + $0x2c] sm:$0xf]
  %v1129 = vld [vmem:[%s1116 + $0x30] sm:$0xf]
  %v1143 = vunpack.c.l.b16 %v1117
  %v1144 = vunpack.c.l.b16 %v1118
  %v1145 = vunpack.c.l.b16 %v1119
  %v1146 = vunpack.c.l.b16 %v1120
  %v1147 = vunpack.c.l.b16 %v1121
  %v1148 = vunpack.c.l.b16 %v1122
  %v1149 = vunpack.c.l.b16 %v1123
  %v1150 = vunpack.c.l.b16 %v1124
  %v1151 = vunpack.c.l.b16 %v1125
  %v1152 = vunpack.c.l.b16 %v1126
  %v1153 = vunpack.c.l.b16 %v1127
  %v1154 = vunpack.c.l.b16 %v1128
  %v1155 = vunpack.c.l.b16 %v1129
  %v1156 = vpack.c.b16 %v1144, %v1143
  %v1157 = vpack.c.b16 %v1146, %v1145
  %v1158 = vpack.c.b16 %v1148, %v1147
  %v1159 = vpack.c.b16 %v1150, %v1149
  %v1160 = vpack.c.b16 %v1152, %v1151
  %v1161 = vpack.c.b16 %v1154, %v1153
  %v1162 = vpack.c.b16 %v1155, %v1155
  %v1170 = vsel %vm991, %v1162, 0
  %1172 = vmatpush.bf16.msra.mxu0 0
  %1173 = vmatpush.bf16.msra.mxu0 %v1170
  %1174 = vmatpush.bf16.msra.mxu0 %v1161
  %1175 = vmatpush.bf16.msra.mxu0 %v1160
  %1176 = vmatpush.bf16.msra.mxu0 %v1159
  %1177 = vmatpush.bf16.msra.mxu0 %v1158
  %1178 = vmatpush.bf16.msra.mxu0 %v1157
  %1179 = vmatpush.bf16.msra.mxu0 %v1156
  %1180 = vmatmul.bf16.gmra.mxu0 %v977
  %v1181 = vpop.f32.mrf.mxu0
  %v1182 = vadd.f32 0.0, %v1181
  %v1183 = vpop.f32.mrf.mxu0
  %v1184 = vadd.f32 0.0, %v1183
  %1185 = vmatmul.bf16.gmra.mxu0 %v980
  %v1186 = vpop.f32.mrf.mxu0
  %v1187 = vadd.f32 0.0, %v1186
  %v1188 = vpop.f32.mrf.mxu0
  %v1189 = vadd.f32 0.0, %v1188
  %1190 = vmatmul.bf16.gmra.mxu0 %v983
  %v1191 = vpop.f32.mrf.mxu0
  %v1192 = vadd.f32 0.0, %v1191
  %v1193 = vpop.f32.mrf.mxu0
  %v1194 = vadd.f32 0.0, %v1193
  %1195 = vmatmul.bf16.gmra.mxu0 %v986
  %v1196 = vpop.f32.mrf.mxu0
  %v1197 = vadd.f32 0.0, %v1196
  %v1198 = vpop.f32.mrf.mxu0
  %v1199 = vadd.f32 0.0, %v1198
  %1200 = vmatmul.bf16.gmra.mxu0 %v989
  %v1201 = vpop.f32.mrf.mxu0
  %v1202 = vpop.f32.mrf.mxu0
  %1203 = vdwg.mxu0
  %v1217 = vunpack.c.l.b16 %v904
  %v1218 = vunpack.c.l.b16 %v905
  %v1219 = vunpack.c.l.b16 %v906
  %v1220 = vunpack.c.l.b16 %v907
  %v1221 = vunpack.c.l.b16 %v908
  %v1222 = vunpack.c.l.b16 %v909
  %v1223 = vunpack.c.l.b16 %v910
  %v1224 = vunpack.c.l.b16 %v911
  %v1225 = vunpack.c.l.b16 %v912
  %v1226 = vunpack.c.l.b16 %v913
  %v1227 = vunpack.c.l.b16 %v914
  %v1228 = vunpack.c.l.b16 %v915
  %v1229 = vunpack.c.l.b16 %v916
  %v1230 = vpack.c.b16 %v1218, %v1217
  %v1231 = vpack.c.b16 %v1220, %v1219
  %v1232 = vpack.c.b16 %v1222, %v1221
  %v1233 = vpack.c.b16 %v1224, %v1223
  %v1234 = vpack.c.b16 %v1226, %v1225
  %v1235 = vpack.c.b16 %v1228, %v1227
  %v1236 = vpack.c.b16 %v1229, %v1229
  %v1244 = vsel %vm991, %v1236, 0
  %1246 = vmatpush.bf16.msra.mxu0 0
  %1247 = vmatpush.bf16.msra.mxu0 %v1244
  %1248 = vmatpush.bf16.msra.mxu0 %v1235
  %1249 = vmatpush.bf16.msra.mxu0 %v1234
  %1250 = vmatpush.bf16.msra.mxu0 %v1233
  %1251 = vmatpush.bf16.msra.mxu0 %v1232
  %1252 = vmatpush.bf16.msra.mxu0 %v1231
  %1253 = vmatpush.bf16.msra.mxu0 %v1230
  %1254 = vmatmul.bf16.gmra.mxu0 %v1067
  %v1255 = vpop.f32.mrf.mxu0
  %v1256 = vadd.f32 %v1182, %v1255
  %v1257 = vpop.f32.mrf.mxu0
  %v1258 = vadd.f32 %v1184, %v1257
  %1259 = vmatmul.bf16.gmra.mxu0 %v1070
  %v1260 = vpop.f32.mrf.mxu0
  %v1261 = vadd.f32 %v1187, %v1260
  %v1262 = vpop.f32.mrf.mxu0
  %v1263 = vadd.f32 %v1189, %v1262
  %1264 = vmatmul.bf16.gmra.mxu0 %v1073
  %v1265 = vpop.f32.mrf.mxu0
  %v1266 = vadd.f32 %v1192, %v1265
  %v1267 = vpop.f32.mrf.mxu0
  %v1268 = vadd.f32 %v1194, %v1267
  %1269 = vmatmul.bf16.gmra.mxu0 %v1076
  %v1270 = vpop.f32.mrf.mxu0
  %v1271 = vadd.f32 %v1197, %v1270
  %v1272 = vpop.f32.mrf.mxu0
  %v1273 = vadd.f32 %v1199, %v1272
  %1274 = vmatmul.bf16.gmra.mxu0 %v1079
  %v1275 = vpop.f32.mrf.mxu0
  %v1276 = vpop.f32.mrf.mxu0
  %1277 = vdwg.mxu0
  %v1278 = vpack.c.bf16 %v882, %v881
  %v1279 = vpack.c.bf16 %v883, %v883
  %s1280 = scalar_lea.vmem %s4, 104
  %v1281 = vld [vmem:[%s1280] sm:$0xf]
  %v1282 = vld [vmem:[%s1280 + $0x4] sm:$0xf]
  %v1283 = vld [vmem:[%s1280 + $0x8] sm:$0xf]
  %v1284 = vld [vmem:[%s1280 + $0xc] sm:$0xf]
  %v1285 = vld [vmem:[%s1280 + $0x10] sm:$0xf]
  %v1286 = vld [vmem:[%s1280 + $0x14] sm:$0xf]
  %v1287 = vld [vmem:[%s1280 + $0x18] sm:$0xf]
  %v1288 = vld [vmem:[%s1280 + $0x1c] sm:$0xf]
  %v1289 = vld [vmem:[%s1280 + $0x20] sm:$0xf]
  %v1290 = vld [vmem:[%s1280 + $0x24] sm:$0xf]
  %v1291 = vld [vmem:[%s1280 + $0x28] sm:$0xf]
  %v1292 = vld [vmem:[%s1280 + $0x2c] sm:$0xf]
  %v1293 = vld [vmem:[%s1280 + $0x30] sm:$0xf]
  %v1307 = vunpack.c.l.b16 %v1281
  %v1308 = vunpack.c.l.b16 %v1282
  %v1309 = vunpack.c.l.b16 %v1283
  %v1310 = vunpack.c.l.b16 %v1284
  %v1311 = vunpack.c.l.b16 %v1285
  %v1312 = vunpack.c.l.b16 %v1286
  %v1313 = vunpack.c.l.b16 %v1287
  %v1314 = vunpack.c.l.b16 %v1288
  %v1315 = vunpack.c.l.b16 %v1289
  %v1316 = vunpack.c.l.b16 %v1290
  %v1317 = vunpack.c.l.b16 %v1291
  %v1318 = vunpack.c.l.b16 %v1292
  %v1319 = vunpack.c.l.b16 %v1293
  %v1320 = vpack.c.b16 %v1308, %v1307
  %v1321 = vpack.c.b16 %v1310, %v1309
  %v1322 = vpack.c.b16 %v1312, %v1311
  %v1323 = vpack.c.b16 %v1314, %v1313
  %v1324 = vpack.c.b16 %v1316, %v1315
  %v1325 = vpack.c.b16 %v1318, %v1317
  %v1326 = vpack.c.b16 %v1319, %v1319
  %v1334 = vsel %vm975, %v1278, 0
  %v1337 = vsel %vm975, %v1279, 0
  %v1340 = vsel %vm991, %v1326, 0
  %1342 = vmatpush.bf16.msra.mxu0 0
  %1343 = vmatpush.bf16.msra.mxu0 %v1340
  %1344 = vmatpush.bf16.msra.mxu0 %v1325
  %1345 = vmatpush.bf16.msra.mxu0 %v1324
  %1346 = vmatpush.bf16.msra.mxu0 %v1323
  %1347 = vmatpush.bf16.msra.mxu0 %v1322
  %1348 = vmatpush.bf16.msra.mxu0 %v1321
  %1349 = vmatpush.bf16.msra.mxu0 %v1320
  %1350 = vmatmul.bf16.gmra.mxu0 %v1070
  %v1351 = vpop.f32.mrf.mxu0
  %v1352 = vadd.f32 0.0, %v1351
  %v1353 = vpop.f32.mrf.mxu0
  %v1354 = vadd.f32 0.0, %v1353
  %1355 = vmatmul.bf16.gmra.mxu0 %v1073
  %v1356 = vpop.f32.mrf.mxu0
  %v1357 = vadd.f32 0.0, %v1356
  %v1358 = vpop.f32.mrf.mxu0
  %v1359 = vadd.f32 0.0, %v1358
  %1360 = vmatmul.bf16.gmra.mxu0 %v1076
  %v1361 = vpop.f32.mrf.mxu0
  %v1362 = vadd.f32 0.0, %v1361
  %v1363 = vpop.f32.mrf.mxu0
  %v1364 = vadd.f32 0.0, %v1363
  %1365 = vmatmul.bf16.gmra.mxu0 %v1334
  %v1366 = vpop.f32.mrf.mxu0
  %v1367 = vadd.f32 0.0, %v1366
  %v1368 = vpop.f32.mrf.mxu0
  %v1369 = vadd.f32 0.0, %v1368
  %1370 = vmatmul.bf16.gmra.mxu0 %v1337
  %v1371 = vpop.f32.mrf.mxu0
  %v1372 = vpop.f32.mrf.mxu0
  %1373 = vdwg.mxu0
  %v1374 = vadd.f32 %v1094, %v1352
  %v1375 = vadd.f32 %v1096, %v1354
  %v1376 = vadd.f32 %v1099, %v1357
  %v1377 = vadd.f32 %v1101, %v1359
  %v1378 = vadd.f32 %v1104, %v1362
  %v1379 = vadd.f32 %v1106, %v1364
  %v1380 = vadd.f32 %v1109, %v1367
  %v1381 = vadd.f32 %v1111, %v1369
  %s1382 = scalar_lea.vmem %s5, 104
  %v1383 = vld [vmem:[%s1382] sm:$0xf]
  %v1384 = vld [vmem:[%s1382 + $0x4] sm:$0xf]
  %v1385 = vld [vmem:[%s1382 + $0x8] sm:$0xf]
  %v1386 = vld [vmem:[%s1382 + $0xc] sm:$0xf]
  %v1387 = vld [vmem:[%s1382 + $0x10] sm:$0xf]
  %v1388 = vld [vmem:[%s1382 + $0x14] sm:$0xf]
  %v1389 = vld [vmem:[%s1382 + $0x18] sm:$0xf]
  %v1390 = vld [vmem:[%s1382 + $0x1c] sm:$0xf]
  %v1391 = vld [vmem:[%s1382 + $0x20] sm:$0xf]
  %v1392 = vld [vmem:[%s1382 + $0x24] sm:$0xf]
  %v1393 = vld [vmem:[%s1382 + $0x28] sm:$0xf]
  %v1394 = vld [vmem:[%s1382 + $0x2c] sm:$0xf]
  %v1395 = vld [vmem:[%s1382 + $0x30] sm:$0xf]
  %v1409 = vunpack.c.l.b16 %v1383
  %v1410 = vunpack.c.l.b16 %v1384
  %v1411 = vunpack.c.l.b16 %v1385
  %v1412 = vunpack.c.l.b16 %v1386
  %v1413 = vunpack.c.l.b16 %v1387
  %v1414 = vunpack.c.l.b16 %v1388
  %v1415 = vunpack.c.l.b16 %v1389
  %v1416 = vunpack.c.l.b16 %v1390
  %v1417 = vunpack.c.l.b16 %v1391
  %v1418 = vunpack.c.l.b16 %v1392
  %v1419 = vunpack.c.l.b16 %v1393
  %v1420 = vunpack.c.l.b16 %v1394
  %v1421 = vunpack.c.l.b16 %v1395
  %v1422 = vpack.c.b16 %v1410, %v1409
  %v1423 = vpack.c.b16 %v1412, %v1411
  %v1424 = vpack.c.b16 %v1414, %v1413
  %v1425 = vpack.c.b16 %v1416, %v1415
  %v1426 = vpack.c.b16 %v1418, %v1417
  %v1427 = vpack.c.b16 %v1420, %v1419
  %v1428 = vpack.c.b16 %v1421, %v1421
  %v1436 = vsel %vm991, %v1428, 0
  %1438 = vmatpush.bf16.msra.mxu0 0
  %1439 = vmatpush.bf16.msra.mxu0 %v1436
  %1440 = vmatpush.bf16.msra.mxu0 %v1427
  %1441 = vmatpush.bf16.msra.mxu0 %v1426
  %1442 = vmatpush.bf16.msra.mxu0 %v1425
  %1443 = vmatpush.bf16.msra.mxu0 %v1424
  %1444 = vmatpush.bf16.msra.mxu0 %v1423
  %1445 = vmatpush.bf16.msra.mxu0 %v1422
  %1446 = vmatmul.bf16.gmra.mxu0 %v1070
  %v1447 = vpop.f32.mrf.mxu0
  %v1448 = vadd.f32 0.0, %v1447
  %v1449 = vpop.f32.mrf.mxu0
  %v1450 = vadd.f32 0.0, %v1449
  %1451 = vmatmul.bf16.gmra.mxu0 %v1073
  %v1452 = vpop.f32.mrf.mxu0
  %v1453 = vadd.f32 0.0, %v1452
  %v1454 = vpop.f32.mrf.mxu0
  %v1455 = vadd.f32 0.0, %v1454
  %1456 = vmatmul.bf16.gmra.mxu0 %v1076
  %v1457 = vpop.f32.mrf.mxu0
  %v1458 = vadd.f32 0.0, %v1457
  %v1459 = vpop.f32.mrf.mxu0
  %v1460 = vadd.f32 0.0, %v1459
  %1461 = vmatmul.bf16.gmra.mxu0 %v1334
  %v1462 = vpop.f32.mrf.mxu0
  %v1463 = vadd.f32 0.0, %v1462
  %v1464 = vpop.f32.mrf.mxu0
  %v1465 = vadd.f32 0.0, %v1464
  %1466 = vmatmul.bf16.gmra.mxu0 %v1337
  %v1467 = vpop.f32.mrf.mxu0
  %v1468 = vpop.f32.mrf.mxu0
  %1469 = vdwg.mxu0
  %v1470 = vadd.f32 %v1256, %v1448
  %v1471 = vadd.f32 %v1258, %v1450
  %v1472 = vadd.f32 %v1261, %v1453
  %v1473 = vadd.f32 %v1263, %v1455
  %v1474 = vadd.f32 %v1266, %v1458
  %v1475 = vadd.f32 %v1268, %v1460
  %v1476 = vadd.f32 %v1271, %v1463
  %v1477 = vadd.f32 %v1273, %v1465
  %v1478 = vpack.c.bf16 %v883, %v882
  %v1479 = vpack.c.bf16 %v884, %v884
  %s1480 = scalar_lea.vmem %s4, 156
  %v1481 = vld [vmem:[%s1480] sm:$0xf]
  %v1482 = vld [vmem:[%s1480 + $0x4] sm:$0xf]
  %v1483 = vld [vmem:[%s1480 + $0x8] sm:$0xf]
  %v1484 = vld [vmem:[%s1480 + $0xc] sm:$0xf]
  %v1485 = vld [vmem:[%s1480 + $0x10] sm:$0xf]
  %v1486 = vld [vmem:[%s1480 + $0x14] sm:$0xf]
  %v1487 = vld [vmem:[%s1480 + $0x18] sm:$0xf]
  %v1488 = vld [vmem:[%s1480 + $0x1c] sm:$0xf]
  %v1489 = vld [vmem:[%s1480 + $0x20] sm:$0xf]
  %v1490 = vld [vmem:[%s1480 + $0x24] sm:$0xf]
  %v1491 = vld [vmem:[%s1480 + $0x28] sm:$0xf]
  %v1492 = vld [vmem:[%s1480 + $0x2c] sm:$0xf]
  %v1493 = vld [vmem:[%s1480 + $0x30] sm:$0xf]
  %v1507 = vunpack.c.l.b16 %v1481
  %v1508 = vunpack.c.l.b16 %v1482
  %v1509 = vunpack.c.l.b16 %v1483
  %v1510 = vunpack.c.l.b16 %v1484
  %v1511 = vunpack.c.l.b16 %v1485
  %v1512 = vunpack.c.l.b16 %v1486
  %v1513 = vunpack.c.l.b16 %v1487
  %v1514 = vunpack.c.l.b16 %v1488
  %v1515 = vunpack.c.l.b16 %v1489
  %v1516 = vunpack.c.l.b16 %v1490
  %v1517 = vunpack.c.l.b16 %v1491
  %v1518 = vunpack.c.l.b16 %v1492
  %v1519 = vunpack.c.l.b16 %v1493
  %v1520 = vpack.c.b16 %v1508, %v1507
  %v1521 = vpack.c.b16 %v1510, %v1509
  %v1522 = vpack.c.b16 %v1512, %v1511
  %v1523 = vpack.c.b16 %v1514, %v1513
  %v1524 = vpack.c.b16 %v1516, %v1515
  %v1525 = vpack.c.b16 %v1518, %v1517
  %v1526 = vpack.c.b16 %v1519, %v1519
  %v1534 = vsel %vm975, %v1478, 0
  %v1537 = vsel %vm975, %v1479, 0
  %v1540 = vsel %vm991, %v1526, 0
  %1542 = vmatpush.bf16.msra.mxu0 0
  %1543 = vmatpush.bf16.msra.mxu0 %v1540
  %1544 = vmatpush.bf16.msra.mxu0 %v1525
  %1545 = vmatpush.bf16.msra.mxu0 %v1524
  %1546 = vmatpush.bf16.msra.mxu0 %v1523
  %1547 = vmatpush.bf16.msra.mxu0 %v1522
  %1548 = vmatpush.bf16.msra.mxu0 %v1521
  %1549 = vmatpush.bf16.msra.mxu0 %v1520
  %1550 = vmatmul.bf16.gmra.mxu0 %v980
  %v1551 = vpop.f32.mrf.mxu0
  %v1552 = vadd.f32 0.0, %v1551
  %v1553 = vpop.f32.mrf.mxu0
  %v1554 = vadd.f32 0.0, %v1553
  %1555 = vmatmul.bf16.gmra.mxu0 %v983
  %v1556 = vpop.f32.mrf.mxu0
  %v1557 = vadd.f32 0.0, %v1556
  %v1558 = vpop.f32.mrf.mxu0
  %v1559 = vadd.f32 0.0, %v1558
  %1560 = vmatmul.bf16.gmra.mxu0 %v986
  %v1561 = vpop.f32.mrf.mxu0
  %v1562 = vadd.f32 0.0, %v1561
  %v1563 = vpop.f32.mrf.mxu0
  %v1564 = vadd.f32 0.0, %v1563
  %1565 = vmatmul.bf16.gmra.mxu0 %v1534
  %v1566 = vpop.f32.mrf.mxu0
  %v1567 = vadd.f32 0.0, %v1566
  %v1568 = vpop.f32.mrf.mxu0
  %v1569 = vadd.f32 0.0, %v1568
  %1570 = vmatmul.bf16.gmra.mxu0 %v1537
  %v1571 = vpop.f32.mrf.mxu0
  %v1572 = vpop.f32.mrf.mxu0
  %1573 = vdwg.mxu0
  %v1574 = vadd.f32 %v1374, %v1552
  %v1575 = vadd.f32 %v1375, %v1554
  %v1576 = vadd.f32 %v1376, %v1557
  %v1577 = vadd.f32 %v1377, %v1559
  %v1578 = vadd.f32 %v1378, %v1562
  %v1579 = vadd.f32 %v1379, %v1564
  %v1580 = vadd.f32 %v1380, %v1567
  %v1581 = vadd.f32 %v1381, %v1569
  %s1582 = scalar_lea.vmem %s5, 156
  %v1583 = vld [vmem:[%s1582] sm:$0xf]
  %v1584 = vld [vmem:[%s1582 + $0x4] sm:$0xf]
  %v1585 = vld [vmem:[%s1582 + $0x8] sm:$0xf]
  %v1586 = vld [vmem:[%s1582 + $0xc] sm:$0xf]
  %v1587 = vld [vmem:[%s1582 + $0x10] sm:$0xf]
  %v1588 = vld [vmem:[%s1582 + $0x14] sm:$0xf]
  %v1589 = vld [vmem:[%s1582 + $0x18] sm:$0xf]
  %v1590 = vld [vmem:[%s1582 + $0x1c] sm:$0xf]
  %v1591 = vld [vmem:[%s1582 + $0x20] sm:$0xf]
  %v1592 = vld [vmem:[%s1582 + $0x24] sm:$0xf]
  %v1593 = vld [vmem:[%s1582 + $0x28] sm:$0xf]
  %v1594 = vld [vmem:[%s1582 + $0x2c] sm:$0xf]
  %v1595 = vld [vmem:[%s1582 + $0x30] sm:$0xf]
  %v1609 = vunpack.c.l.b16 %v1583
  %v1610 = vunpack.c.l.b16 %v1584
  %v1611 = vunpack.c.l.b16 %v1585
  %v1612 = vunpack.c.l.b16 %v1586
  %v1613 = vunpack.c.l.b16 %v1587
  %v1614 = vunpack.c.l.b16 %v1588
  %v1615 = vunpack.c.l.b16 %v1589
  %v1616 = vunpack.c.l.b16 %v1590
  %v1617 = vunpack.c.l.b16 %v1591
  %v1618 = vunpack.c.l.b16 %v1592
  %v1619 = vunpack.c.l.b16 %v1593
  %v1620 = vunpack.c.l.b16 %v1594
  %v1621 = vunpack.c.l.b16 %v1595
  %v1622 = vpack.c.b16 %v1610, %v1609
  %v1623 = vpack.c.b16 %v1612, %v1611
  %v1624 = vpack.c.b16 %v1614, %v1613
  %v1625 = vpack.c.b16 %v1616, %v1615
  %v1626 = vpack.c.b16 %v1618, %v1617
  %v1627 = vpack.c.b16 %v1620, %v1619
  %v1628 = vpack.c.b16 %v1621, %v1621
  %v1636 = vsel %vm991, %v1628, 0
  %1638 = vmatpush.bf16.msra.mxu0 0
  %1639 = vmatpush.bf16.msra.mxu0 %v1636
  %1640 = vmatpush.bf16.msra.mxu0 %v1627
  %1641 = vmatpush.bf16.msra.mxu0 %v1626
  %1642 = vmatpush.bf16.msra.mxu0 %v1625
  %1643 = vmatpush.bf16.msra.mxu0 %v1624
  %1644 = vmatpush.bf16.msra.mxu0 %v1623
  %1645 = vmatpush.bf16.msra.mxu0 %v1622
  %1646 = vmatmul.bf16.gmra.mxu0 %v980
  %v1647 = vpop.f32.mrf.mxu0
  %v1648 = vadd.f32 0.0, %v1647
  %v1649 = vpop.f32.mrf.mxu0
  %v1650 = vadd.f32 0.0, %v1649
  %1651 = vmatmul.bf16.gmra.mxu0 %v983
  %v1652 = vpop.f32.mrf.mxu0
  %v1653 = vadd.f32 0.0, %v1652
  %v1654 = vpop.f32.mrf.mxu0
  %v1655 = vadd.f32 0.0, %v1654
  %1656 = vmatmul.bf16.gmra.mxu0 %v986
  %v1657 = vpop.f32.mrf.mxu0
  %v1658 = vadd.f32 0.0, %v1657
  %v1659 = vpop.f32.mrf.mxu0
  %v1660 = vadd.f32 0.0, %v1659
  %1661 = vmatmul.bf16.gmra.mxu0 %v1534
  %v1662 = vpop.f32.mrf.mxu0
  %v1663 = vadd.f32 0.0, %v1662
  %v1664 = vpop.f32.mrf.mxu0
  %v1665 = vadd.f32 0.0, %v1664
  %1666 = vmatmul.bf16.gmra.mxu0 %v1537
  %v1667 = vpop.f32.mrf.mxu0
  %v1668 = vpop.f32.mrf.mxu0
  %1669 = vdwg.mxu0
  %v1670 = vadd.f32 %v1470, %v1648
  %v1671 = vadd.f32 %v1471, %v1650
  %v1672 = vadd.f32 %v1472, %v1653
  %v1673 = vadd.f32 %v1473, %v1655
  %v1674 = vadd.f32 %v1474, %v1658
  %v1675 = vadd.f32 %v1475, %v1660
  %v1676 = vadd.f32 %v1476, %v1663
  %v1677 = vadd.f32 %v1477, %v1665
  %v1678 = vpack.c.bf16 %v884, %v883
  %v1679 = vpack.c.bf16 %v885, %v885
  %s1680 = scalar_lea.vmem %s4, 208
  %v1681 = vld [vmem:[%s1680] sm:$0xf]
  %v1682 = vld [vmem:[%s1680 + $0x4] sm:$0xf]
  %v1683 = vld [vmem:[%s1680 + $0x8] sm:$0xf]
  %v1684 = vld [vmem:[%s1680 + $0xc] sm:$0xf]
  %v1685 = vld [vmem:[%s1680 + $0x10] sm:$0xf]
  %v1686 = vld [vmem:[%s1680 + $0x14] sm:$0xf]
  %v1687 = vld [vmem:[%s1680 + $0x18] sm:$0xf]
  %v1688 = vld [vmem:[%s1680 + $0x1c] sm:$0xf]
  %v1689 = vld [vmem:[%s1680 + $0x20] sm:$0xf]
  %v1690 = vld [vmem:[%s1680 + $0x24] sm:$0xf]
  %v1691 = vld [vmem:[%s1680 + $0x28] sm:$0xf]
  %v1692 = vld [vmem:[%s1680 + $0x2c] sm:$0xf]
  %v1693 = vld [vmem:[%s1680 + $0x30] sm:$0xf]
  %v1707 = vunpack.c.l.b16 %v1681
  %v1708 = vunpack.c.l.b16 %v1682
  %v1709 = vunpack.c.l.b16 %v1683
  %v1710 = vunpack.c.l.b16 %v1684
  %v1711 = vunpack.c.l.b16 %v1685
  %v1712 = vunpack.c.l.b16 %v1686
  %v1713 = vunpack.c.l.b16 %v1687
  %v1714 = vunpack.c.l.b16 %v1688
  %v1715 = vunpack.c.l.b16 %v1689
  %v1716 = vunpack.c.l.b16 %v1690
  %v1717 = vunpack.c.l.b16 %v1691
  %v1718 = vunpack.c.l.b16 %v1692
  %v1719 = vunpack.c.l.b16 %v1693
  %v1720 = vpack.c.b16 %v1708, %v1707
  %v1721 = vpack.c.b16 %v1710, %v1709
  %v1722 = vpack.c.b16 %v1712, %v1711
  %v1723 = vpack.c.b16 %v1714, %v1713
  %v1724 = vpack.c.b16 %v1716, %v1715
  %v1725 = vpack.c.b16 %v1718, %v1717
  %v1726 = vpack.c.b16 %v1719, %v1719
  %v1734 = vsel %vm975, %v1678, 0
  %v1737 = vsel %vm975, %v1679, 0
  %v1740 = vsel %vm991, %v1726, 0
  %1742 = vmatpush.bf16.msra.mxu0 0
  %1743 = vmatpush.bf16.msra.mxu0 %v1740
  %1744 = vmatpush.bf16.msra.mxu0 %v1725
  %1745 = vmatpush.bf16.msra.mxu0 %v1724
  %1746 = vmatpush.bf16.msra.mxu0 %v1723
  %1747 = vmatpush.bf16.msra.mxu0 %v1722
  %1748 = vmatpush.bf16.msra.mxu0 %v1721
  %1749 = vmatpush.bf16.msra.mxu0 %v1720
  %1750 = vmatmul.bf16.gmra.mxu0 %v1073
  %v1751 = vpop.f32.mrf.mxu0
  %v1752 = vadd.f32 0.0, %v1751
  %v1753 = vpop.f32.mrf.mxu0
  %v1754 = vadd.f32 0.0, %v1753
  %1755 = vmatmul.bf16.gmra.mxu0 %v1076
  %v1756 = vpop.f32.mrf.mxu0
  %v1757 = vadd.f32 0.0, %v1756
  %v1758 = vpop.f32.mrf.mxu0
  %v1759 = vadd.f32 0.0, %v1758
  %1760 = vmatmul.bf16.gmra.mxu0 %v1334
  %v1761 = vpop.f32.mrf.mxu0
  %v1762 = vadd.f32 0.0, %v1761
  %v1763 = vpop.f32.mrf.mxu0
  %v1764 = vadd.f32 0.0, %v1763
  %1765 = vmatmul.bf16.gmra.mxu0 %v1734
  %v1766 = vpop.f32.mrf.mxu0
  %v1767 = vadd.f32 0.0, %v1766
  %v1768 = vpop.f32.mrf.mxu0
  %v1769 = vadd.f32 0.0, %v1768
  %1770 = vmatmul.bf16.gmra.mxu0 %v1737
  %v1771 = vpop.f32.mrf.mxu0
  %v1772 = vpop.f32.mrf.mxu0
  %1773 = vdwg.mxu0
  %v1774 = vadd.f32 %v1574, %v1752
  %v1775 = vadd.f32 %v1575, %v1754
  %v1776 = vadd.f32 %v1576, %v1757
  %v1777 = vadd.f32 %v1577, %v1759
  %v1778 = vadd.f32 %v1578, %v1762
  %v1779 = vadd.f32 %v1579, %v1764
  %v1780 = vadd.f32 %v1580, %v1767
  %v1781 = vadd.f32 %v1581, %v1769
  %s1782 = scalar_lea.vmem %s5, 208
  %v1783 = vld [vmem:[%s1782] sm:$0xf]
  %v1784 = vld [vmem:[%s1782 + $0x4] sm:$0xf]
  %v1785 = vld [vmem:[%s1782 + $0x8] sm:$0xf]
  %v1786 = vld [vmem:[%s1782 + $0xc] sm:$0xf]
  %v1787 = vld [vmem:[%s1782 + $0x10] sm:$0xf]
  %v1788 = vld [vmem:[%s1782 + $0x14] sm:$0xf]
  %v1789 = vld [vmem:[%s1782 + $0x18] sm:$0xf]
  %v1790 = vld [vmem:[%s1782 + $0x1c] sm:$0xf]
  %v1791 = vld [vmem:[%s1782 + $0x20] sm:$0xf]
  %v1792 = vld [vmem:[%s1782 + $0x24] sm:$0xf]
  %v1793 = vld [vmem:[%s1782 + $0x28] sm:$0xf]
  %v1794 = vld [vmem:[%s1782 + $0x2c] sm:$0xf]
  %v1795 = vld [vmem:[%s1782 + $0x30] sm:$0xf]
  %v1809 = vunpack.c.l.b16 %v1783
  %v1810 = vunpack.c.l.b16 %v1784
  %v1811 = vunpack.c.l.b16 %v1785
  %v1812 = vunpack.c.l.b16 %v1786
  %v1813 = vunpack.c.l.b16 %v1787
  %v1814 = vunpack.c.l.b16 %v1788
  %v1815 = vunpack.c.l.b16 %v1789
  %v1816 = vunpack.c.l.b16 %v1790
  %v1817 = vunpack.c.l.b16 %v1791
  %v1818 = vunpack.c.l.b16 %v1792
  %v1819 = vunpack.c.l.b16 %v1793
  %v1820 = vunpack.c.l.b16 %v1794
  %v1821 = vunpack.c.l.b16 %v1795
  %v1822 = vpack.c.b16 %v1810, %v1809
  %v1823 = vpack.c.b16 %v1812, %v1811
  %v1824 = vpack.c.b16 %v1814, %v1813
  %v1825 = vpack.c.b16 %v1816, %v1815
  %v1826 = vpack.c.b16 %v1818, %v1817
  %v1827 = vpack.c.b16 %v1820, %v1819
  %v1828 = vpack.c.b16 %v1821, %v1821
  %v1836 = vsel %vm991, %v1828, 0
  %1838 = vmatpush.bf16.msra.mxu0 0
  %1839 = vmatpush.bf16.msra.mxu0 %v1836
  %1840 = vmatpush.bf16.msra.mxu0 %v1827
  %1841 = vmatpush.bf16.msra.mxu0 %v1826
  %1842 = vmatpush.bf16.msra.mxu0 %v1825
  %1843 = vmatpush.bf16.msra.mxu0 %v1824
  %1844 = vmatpush.bf16.msra.mxu0 %v1823
  %1845 = vmatpush.bf16.msra.mxu0 %v1822
  %1846 = vmatmul.bf16.gmra.mxu0 %v1073
  %v1847 = vpop.f32.mrf.mxu0
  %v1848 = vadd.f32 0.0, %v1847
  %v1849 = vpop.f32.mrf.mxu0
  %v1850 = vadd.f32 0.0, %v1849
  %1851 = vmatmul.bf16.gmra.mxu0 %v1076
  %v1852 = vpop.f32.mrf.mxu0
  %v1853 = vadd.f32 0.0, %v1852
  %v1854 = vpop.f32.mrf.mxu0
  %v1855 = vadd.f32 0.0, %v1854
  %1856 = vmatmul.bf16.gmra.mxu0 %v1334
  %v1857 = vpop.f32.mrf.mxu0
  %v1858 = vadd.f32 0.0, %v1857
  %v1859 = vpop.f32.mrf.mxu0
  %v1860 = vadd.f32 0.0, %v1859
  %1861 = vmatmul.bf16.gmra.mxu0 %v1734
  %v1862 = vpop.f32.mrf.mxu0
  %v1863 = vadd.f32 0.0, %v1862
  %v1864 = vpop.f32.mrf.mxu0
  %v1865 = vadd.f32 0.0, %v1864
  %1866 = vmatmul.bf16.gmra.mxu0 %v1737
  %v1867 = vpop.f32.mrf.mxu0
  %v1868 = vpop.f32.mrf.mxu0
  %1869 = vdwg.mxu0
  %v1870 = vadd.f32 %v1670, %v1848
  %v1871 = vadd.f32 %v1671, %v1850
  %v1872 = vadd.f32 %v1672, %v1853
  %v1873 = vadd.f32 %v1673, %v1855
  %v1874 = vadd.f32 %v1674, %v1858
  %v1875 = vadd.f32 %v1675, %v1860
  %v1876 = vadd.f32 %v1676, %v1863
  %v1877 = vadd.f32 %v1677, %v1865
  %v1878 = vmax.f32 %v1774, %v1870
  %v1879 = vmax.f32 %v1775, %v1871
  %v1880 = vmax.f32 %v1776, %v1872
  %v1881 = vmax.f32 %v1777, %v1873
  %v1882 = vmax.f32 %v1778, %v1874
  %v1883 = vmax.f32 %v1779, %v1875
  %v1884 = vmax.f32 %v1780, %v1876
  %v1885 = vmax.f32 %v1781, %v1877
  %v1886 = vld [vmem:[%s6] sm:$0x1]
  %v1888 = vperm.slane %v1886, 0
  %v1890 = vadd.f32 %v1878, %v1888
  %v1891 = vadd.f32 %v1879, %v1888
  %v1892 = vadd.f32 %v1880, %v1888
  %v1893 = vadd.f32 %v1881, %v1888
  %v1894 = vadd.f32 %v1882, %v1888
  %v1895 = vadd.f32 %v1883, %v1888
  %v1896 = vadd.f32 %v1884, %v1888
  %v1897 = vadd.f32 %v1885, %v1888
  %v1898 = vmax.f32 %v1890, 0.0
  %v1899 = vmax.f32 %v1891, 0.0
  %v1900 = vmax.f32 %v1892, 0.0
  %v1901 = vmax.f32 %v1893, 0.0
  %v1902 = vmax.f32 %v1894, 0.0
  %v1903 = vmax.f32 %v1895, 0.0
  %v1904 = vmax.f32 %v1896, 0.0
  %v1905 = vmax.f32 %v1897, 0.0
  %v1906 = vmax.f32 %v1898, %v1899
  %v1907 = vmax.f32 %v1900, %v1901
  %v1908 = vmax.f32 %v1902, %v1903
  %v1909 = vmax.f32 %v1904, %v1905
  %v1910 = vpack.c.bf16 %v1906, %v1906
  %v1911 = vld [vmem:[%s7] sm:$0xf]
  %v1912 = vld [vmem:[%s7 + $0x4] sm:$0xf]
  %v1913 = vld [vmem:[%s7 + $0x8] sm:$0xf]
  %v1914 = vld [vmem:[%s7 + $0xc] sm:$0xf]
  %v1915 = vld [vmem:[%s7 + $0x10] sm:$0xf]
  %v1916 = vld [vmem:[%s7 + $0x14] sm:$0xf]
  %v1917 = vld [vmem:[%s7 + $0x18] sm:$0xf]
  %v1918 = vld [vmem:[%s7 + $0x1c] sm:$0xf]
  %v1919 = vpack.c.bf16 %v1907, %v1907
  %s1920 = scalar_lea.vmem %s7, 32
  %v1921 = vld [vmem:[%s1920] sm:$0xf]
  %v1922 = vld [vmem:[%s1920 + $0x4] sm:$0xf]
  %v1923 = vld [vmem:[%s1920 + $0x8] sm:$0xf]
  %v1924 = vld [vmem:[%s1920 + $0xc] sm:$0xf]
  %v1925 = vld [vmem:[%s1920 + $0x10] sm:$0xf]
  %v1926 = vld [vmem:[%s1920 + $0x14] sm:$0xf]
  %v1927 = vld [vmem:[%s1920 + $0x18] sm:$0xf]
  %v1928 = vld [vmem:[%s1920 + $0x1c] sm:$0xf]
  %v1937 = vunpack.c.l.b16 %v1921
  %v1938 = vunpack.c.l.b16 %v1922
  %v1939 = vunpack.c.l.b16 %v1923
  %v1940 = vunpack.c.l.b16 %v1924
  %v1941 = vunpack.c.l.b16 %v1925
  %v1942 = vunpack.c.l.b16 %v1926
  %v1943 = vunpack.c.l.b16 %v1927
  %v1944 = vunpack.c.l.b16 %v1928
  %v1945 = vpack.c.b16 %v1938, %v1937
  %v1946 = vpack.c.b16 %v1940, %v1939
  %v1947 = vpack.c.b16 %v1942, %v1941
  %v1948 = vpack.c.b16 %v1944, %v1943
  %vm1953 = vcmask 523264
  %v1955 = vsel %vm1953, %v1919, 0
  %1957 = vmatpush.bf16.msra.mxu0 0
  %1958 = vmatpush.bf16.msra.mxu0 0
  %1959 = vmatpush.bf16.msra.mxu0 0
  %1960 = vmatpush.bf16.msra.mxu0 0
  %1961 = vmatpush.bf16.msra.mxu0 %v1948
  %1962 = vmatpush.bf16.msra.mxu0 %v1947
  %1963 = vmatpush.bf16.msra.mxu0 %v1946
  %1964 = vmatpush.bf16.msra.mxu0 %v1945
  %1965 = vmatmul.bf16.gmra.mxu0 %v1955
  %v1966 = vpop.f32.mrf.mxu0
  %v1967 = vadd.f32 0.0, %v1966
  %v1968 = vpop.f32.mrf.mxu0
  %1969 = vdwg.mxu0
  %v1978 = vunpack.c.l.b16 %v1911
  %v1979 = vunpack.c.l.b16 %v1912
  %v1980 = vunpack.c.l.b16 %v1913
  %v1981 = vunpack.c.l.b16 %v1914
  %v1982 = vunpack.c.l.b16 %v1915
  %v1983 = vunpack.c.l.b16 %v1916
  %v1984 = vunpack.c.l.b16 %v1917
  %v1985 = vunpack.c.l.b16 %v1918
  %v1986 = vpack.c.b16 %v1979, %v1978
  %v1987 = vpack.c.b16 %v1981, %v1980
  %v1988 = vpack.c.b16 %v1983, %v1982
  %v1989 = vpack.c.b16 %v1985, %v1984
  %v1995 = vsel %vm1953, %v1910, 0
  %1997 = vmatpush.bf16.msra.mxu0 0
  %1998 = vmatpush.bf16.msra.mxu0 0
  %1999 = vmatpush.bf16.msra.mxu0 0
  %2000 = vmatpush.bf16.msra.mxu0 0
  %2001 = vmatpush.bf16.msra.mxu0 %v1989
  %2002 = vmatpush.bf16.msra.mxu0 %v1988
  %2003 = vmatpush.bf16.msra.mxu0 %v1987
  %2004 = vmatpush.bf16.msra.mxu0 %v1986
  %2005 = vmatmul.bf16.gmra.mxu0 %v1995
  %v2006 = vpop.f32.mrf.mxu0
  %v2007 = vadd.f32 %v1967, %v2006
  %v2008 = vpop.f32.mrf.mxu0
  %2009 = vdwg.mxu0
  %v2010 = vpack.c.bf16 %v1908, %v1908
  %s2011 = scalar_lea.vmem %s7, 64
  %v2012 = vld [vmem:[%s2011] sm:$0xf]
  %v2013 = vld [vmem:[%s2011 + $0x4] sm:$0xf]
  %v2014 = vld [vmem:[%s2011 + $0x8] sm:$0xf]
  %v2015 = vld [vmem:[%s2011 + $0xc] sm:$0xf]
  %v2016 = vld [vmem:[%s2011 + $0x10] sm:$0xf]
  %v2017 = vld [vmem:[%s2011 + $0x14] sm:$0xf]
  %v2018 = vld [vmem:[%s2011 + $0x18] sm:$0xf]
  %v2019 = vld [vmem:[%s2011 + $0x1c] sm:$0xf]
  %v2028 = vunpack.c.l.b16 %v2012
  %v2029 = vunpack.c.l.b16 %v2013
  %v2030 = vunpack.c.l.b16 %v2014
  %v2031 = vunpack.c.l.b16 %v2015
  %v2032 = vunpack.c.l.b16 %v2016
  %v2033 = vunpack.c.l.b16 %v2017
  %v2034 = vunpack.c.l.b16 %v2018
  %v2035 = vunpack.c.l.b16 %v2019
  %v2036 = vpack.c.b16 %v2029, %v2028
  %v2037 = vpack.c.b16 %v2031, %v2030
  %v2038 = vpack.c.b16 %v2033, %v2032
  %v2039 = vpack.c.b16 %v2035, %v2034
  %v2045 = vsel %vm1953, %v2010, 0
  %2047 = vmatpush.bf16.msra.mxu0 0
  %2048 = vmatpush.bf16.msra.mxu0 0
  %2049 = vmatpush.bf16.msra.mxu0 0
  %2050 = vmatpush.bf16.msra.mxu0 0
  %2051 = vmatpush.bf16.msra.mxu0 %v2039
  %2052 = vmatpush.bf16.msra.mxu0 %v2038
  %2053 = vmatpush.bf16.msra.mxu0 %v2037
  %2054 = vmatpush.bf16.msra.mxu0 %v2036
  %2055 = vmatmul.bf16.gmra.mxu0 %v2045
  %v2056 = vpop.f32.mrf.mxu0
  %v2057 = vadd.f32 0.0, %v2056
  %v2058 = vpop.f32.mrf.mxu0
  %2059 = vdwg.mxu0
  %v2060 = vadd.f32 %v2007, %v2057
  %v2061 = vpack.c.bf16 %v1909, %v1909
  %s2062 = scalar_lea.vmem %s7, 96
  %v2063 = vld [vmem:[%s2062] sm:$0xf]
  %v2064 = vld [vmem:[%s2062 + $0x4] sm:$0xf]
  %v2065 = vld [vmem:[%s2062 + $0x8] sm:$0xf]
  %v2066 = vld [vmem:[%s2062 + $0xc] sm:$0xf]
  %v2067 = vld [vmem:[%s2062 + $0x10] sm:$0xf]
  %v2068 = vld [vmem:[%s2062 + $0x14] sm:$0xf]
  %v2069 = vld [vmem:[%s2062 + $0x18] sm:$0xf]
  %v2070 = vld [vmem:[%s2062 + $0x1c] sm:$0xf]
  %v2079 = vunpack.c.l.b16 %v2063
  %v2080 = vunpack.c.l.b16 %v2064
  %v2081 = vunpack.c.l.b16 %v2065
  %v2082 = vunpack.c.l.b16 %v2066
  %v2083 = vunpack.c.l.b16 %v2067
  %v2084 = vunpack.c.l.b16 %v2068
  %v2085 = vunpack.c.l.b16 %v2069
  %v2086 = vunpack.c.l.b16 %v2070
  %v2087 = vpack.c.b16 %v2080, %v2079
  %v2088 = vpack.c.b16 %v2082, %v2081
  %v2089 = vpack.c.b16 %v2084, %v2083
  %v2090 = vpack.c.b16 %v2086, %v2085
  %v2096 = vsel %vm1953, %v2061, 0
  %2098 = vmatpush.bf16.msra.mxu0 0
  %2099 = vmatpush.bf16.msra.mxu0 0
  %2100 = vmatpush.bf16.msra.mxu0 0
  %2101 = vmatpush.bf16.msra.mxu0 0
  %2102 = vmatpush.bf16.msra.mxu0 %v2090
  %2103 = vmatpush.bf16.msra.mxu0 %v2089
  %2104 = vmatpush.bf16.msra.mxu0 %v2088
  %2105 = vmatpush.bf16.msra.mxu0 %v2087
  %2106 = vmatmul.bf16.gmra.mxu0 %v2096
  %v2107 = vpop.f32.mrf.mxu0
  %v2108 = vadd.f32 0.0, %v2107
  %v2109 = vpop.f32.mrf.mxu0
  %2110 = vdwg.mxu0
  %v2111 = vadd.f32 %v2060, %v2108
  %v2112 = vld [vmem:[%s8] sm:$0x1]
  %v2114 = vperm.slane %v2112, 0
  %v2116 = vadd.f32 %v2111, %v2114
  %v2117 = vmax.f32 %v2116, 0.0
  %v2118 = vpack.c.bf16 %v2117, %v2117
  %v2119 = vld [vmem:[%s9] sm:$0xf]
  %v2120 = vld [vmem:[%s9 + $0x4] sm:$0xf]
  %v2121 = vld [vmem:[%s9 + $0x8] sm:$0xf]
  %v2122 = vld [vmem:[%s9 + $0xc] sm:$0xf]
  %v2123 = vld [vmem:[%s9 + $0x10] sm:$0xf]
  %v2124 = vld [vmem:[%s9 + $0x14] sm:$0xf]
  %v2125 = vld [vmem:[%s9 + $0x18] sm:$0xf]
  %v2126 = vld [vmem:[%s9 + $0x1c] sm:$0xf]
  %v2127 = vld [vmem:[%s9 + $0x20] sm:$0xf]
  %v2128 = vld [vmem:[%s9 + $0x24] sm:$0xf]
  %v2129 = vld [vmem:[%s9 + $0x28] sm:$0xf]
  %v2130 = vld [vmem:[%s9 + $0x2c] sm:$0xf]
  %v2131 = vld [vmem:[%s9 + $0x30] sm:$0xf]
  %v2132 = vld [vmem:[%s9 + $0x34] sm:$0xf]
  %v2133 = vld [vmem:[%s9 + $0x38] sm:$0xf]
  %v2134 = vld [vmem:[%s10] sm:$0x1]
  %v2136 = vperm.slane %v2134, 0
  %v2153 = vunpack.c.l.b16 %v2119
  %v2154 = vunpack.c.l.b16 %v2120
  %v2155 = vunpack.c.l.b16 %v2121
  %v2156 = vunpack.c.l.b16 %v2122
  %v2157 = vunpack.c.l.b16 %v2123
  %v2158 = vunpack.c.l.b16 %v2124
  %v2159 = vunpack.c.l.b16 %v2125
  %v2160 = vunpack.c.l.b16 %v2126
  %v2161 = vunpack.c.l.b16 %v2127
  %v2162 = vunpack.c.l.b16 %v2128
  %v2163 = vunpack.c.l.b16 %v2129
  %v2164 = vunpack.c.l.b16 %v2130
  %v2165 = vunpack.c.l.b16 %v2131
  %v2166 = vunpack.c.l.b16 %v2132
  %v2167 = vunpack.c.l.b16 %v2133
  %v2168 = vpack.c.b16 %v2154, %v2153
  %v2169 = vpack.c.b16 %v2156, %v2155
  %v2170 = vpack.c.b16 %v2158, %v2157
  %v2171 = vpack.c.b16 %v2160, %v2159
  %v2172 = vpack.c.b16 %v2162, %v2161
  %v2173 = vpack.c.b16 %v2164, %v2163
  %v2174 = vpack.c.b16 %v2166, %v2165
  %v2175 = vpack.c.b16 %v2167, %v2167
  %vm2183 = vcmask 982016
  %v2185 = vsel %vm2183, %v2118, 0
  %v2188 = vsel %vm991, %v2175, 0
  %2190 = vmatpush.bf16.msra.mxu0 %v2188
  %2191 = vmatpush.bf16.msra.mxu0 %v2174
  %2192 = vmatpush.bf16.msra.mxu0 %v2173
  %2193 = vmatpush.bf16.msra.mxu0 %v2172
  %2194 = vmatpush.bf16.msra.mxu0 %v2171
  %2195 = vmatpush.bf16.msra.mxu0 %v2170
  %2196 = vmatpush.bf16.msra.mxu0 %v2169
  %2197 = vmatpush.bf16.msra.mxu0 %v2168
  %2198 = vmatmul.bf16.gmra.mxu0 %v2185
  %v2199 = vpop.f32.mrf.mxu0
  %v2200 = vadd.f32 %v2136, %v2199
  %v2201 = vpop.f32.mrf.mxu0
  %2202 = vdwg.mxu0
  %v2203 = vmax.f32 %v2200, 0.0
  %v2204 = vpack.c.bf16 %v2203, %v2203
  %v2205 = vld [vmem:[%s11] sm:$0xf]
  %v2206 = vld [vmem:[%s11 + $0x4] sm:$0xf]
  %v2207 = vld [vmem:[%s11 + $0x8] sm:$0xf]
  %v2208 = vld [vmem:[%s11 + $0xc] sm:$0xf]
  %v2209 = vld [vmem:[%s11 + $0x10] sm:$0xf]
  %v2210 = vld [vmem:[%s11 + $0x14] sm:$0xf]
  %v2211 = vld [vmem:[%s11 + $0x18] sm:$0xf]
  %v2212 = vld [vmem:[%s11 + $0x1c] sm:$0xf]
  %v2213 = vld [vmem:[%s11 + $0x20] sm:$0xf]
  %v2214 = vld [vmem:[%s11 + $0x24] sm:$0xf]
  %v2215 = vld [vmem:[%s11 + $0x28] sm:$0x3]
  %v2216 = vld [vmem:[%s12] sm:$0x1]
  %v2218 = vperm.slane %v2216, 0
  %v2231 = vunpack.c.l.b16 %v2205
  %v2232 = vunpack.c.l.b16 %v2206
  %v2233 = vunpack.c.l.b16 %v2207
  %v2234 = vunpack.c.l.b16 %v2208
  %v2235 = vunpack.c.l.b16 %v2209
  %v2236 = vunpack.c.l.b16 %v2210
  %v2237 = vunpack.c.l.b16 %v2211
  %v2238 = vunpack.c.l.b16 %v2212
  %v2239 = vunpack.c.l.b16 %v2213
  %v2240 = vunpack.c.l.b16 %v2214
  %v2241 = vunpack.c.l.b16 %v2215
  %v2242 = vpack.c.b16 %v2232, %v2231
  %v2243 = vpack.c.b16 %v2234, %v2233
  %v2244 = vpack.c.b16 %v2236, %v2235
  %v2245 = vpack.c.b16 %v2238, %v2237
  %v2246 = vpack.c.b16 %v2240, %v2239
  %v2247 = vpack.c.b16 %v2241, %v2241
  %vm2253 = vcmask 687104
  %v2255 = vsel %vm2253, %v2204, 0
  %vm2257 = vcmask 1041408
  %v2259 = vsel %vm2257, %v2247, 0
  %2261 = vmatpush.bf16.msra.mxu0 0
  %2262 = vmatpush.bf16.msra.mxu0 0
  %2263 = vmatpush.bf16.msra.mxu0 %v2259
  %2264 = vmatpush.bf16.msra.mxu0 %v2246
  %2265 = vmatpush.bf16.msra.mxu0 %v2245
  %2266 = vmatpush.bf16.msra.mxu0 %v2244
  %2267 = vmatpush.bf16.msra.mxu0 %v2243
  %2268 = vmatpush.bf16.msra.mxu0 %v2242
  %2269 = vmatmul.bf16.gmra.mxu0 %v2255
  %v2270 = vpop.f32.mrf.mxu0
  %v2271 = vadd.f32 %v2218, %v2270
  %v2272 = vpop.f32.mrf.mxu0
  %2273 = vdwg.mxu0
  %vm2274 = vcmask 80896
  %2275 = vst.msk [vmem:[%s13] sm:$0xff] %vm2274, %v2271
  // Predicated region
  $region54: #{mnist_cnn_forward.1} parent=0 // pred_check
    _
  $region55: #{mnist_cnn_forward.1} parent=0 // pred_check_branch
    %2277 = sbr.rel (0) target = $region57
  $region56: #{mnist_cnn_forward.1} parent=0 // pred_region
    _
  $region57: #{mnist_cnn_forward.1} parent=0 // pred_fallthru
    _
  // Predicated region
  $region58: #{mnist_cnn_forward.1} parent=0 // pred_check
    _
  $region59: #{mnist_cnn_forward.1} parent=0 // pred_check_branch
    %2279 = sbr.rel (0) target = $region61
  $region60: #{mnist_cnn_forward.1} parent=0 // pred_region
    _
  $region61: #{mnist_cnn_forward.1} parent=0 // pred_fallthru
    _

</llo_original>
